<compile_context>
chip_gen: v7x
topology: tpu7x:2x2x1
jax: 0.10.0
libtpu: 0.0.40
codegen_flags: <defaults>
</compile_context>

<pallas_src>
import jax
import jax.numpy as jnp
from jax.experimental import pallas as pl
from jax.experimental.pallas import tpu as pltpu


def fc_kernel(xd_ref, xp_ref, w1d_ref, w1p_ref, b1_ref, w2_ref, b2_ref,
              w3_ref, b3_ref, w4_ref, b4_ref, o_ref):
    # Layer 1: concat fused as two accumulating matmuls over the split W1 rows.
    xd = xd_ref[...].astype(jnp.bfloat16)
    xp = xp_ref[...].astype(jnp.bfloat16)
    h = jnp.dot(xd, w1d_ref[...], preferred_element_type=jnp.float32)
    h = h + jnp.dot(xp, w1p_ref[...], preferred_element_type=jnp.float32)
    h = jnp.maximum(h + b1_ref[...], 0.0)                 # f32 bias/ReLU
    # Layer 2: [TM, 1024] @ [1024, 512]
    h = jnp.dot(h.astype(jnp.bfloat16), w2_ref[...],
                preferred_element_type=jnp.float32)
    h = jnp.maximum(h + b2_ref[...], 0.0)
    # Layer 3: [TM, 512] @ [512, 256]
    h = jnp.dot(h.astype(jnp.bfloat16), w3_ref[...],
                preferred_element_type=jnp.float32)
    h = jnp.maximum(h + b3_ref[...], 0.0)
    # Layer 4 (head, columns padded to a lane-dense 128): [TM, 256] @ [256, 128]
    o = jnp.dot(h.astype(jnp.bfloat16), w4_ref[...],
                preferred_element_type=jnp.float32)
    o_ref[...] = (o + b4_ref[...]).astype(o_ref.dtype)


def prepare_params(params, output_dim):
    """One-time repack of f32 PyTorch-layout params ([in, out] weights):
    split W1 rows (fuses the concat), cast weights to bf16, pad head to 128."""
    D = output_dim
    n_output = params["w4"].shape[1]
    n_pad = 128 * (-(-n_output // 128))  # lane-dense output columns
    packed = {
        "w1d": params["w1"][:D].astype(jnp.bfloat16),
        "w1p": params["w1"][D:].astype(jnp.bfloat16),
        "b1":  params["b1"].astype(jnp.float32),
        "w2":  params["w2"].astype(jnp.bfloat16),
        "b2":  params["b2"].astype(jnp.float32),
        "w3":  params["w3"].astype(jnp.bfloat16),
        "b3":  params["b3"].astype(jnp.float32),
        "w4":  jnp.pad(params["w4"],
                       ((0, 0), (0, n_pad - n_output))).astype(jnp.bfloat16),
        "b4":  jnp.pad(params["b4"],
                       ((0, 0), (0, n_pad - n_output))).astype(jnp.float32),
    }
    return packed, n_output


def fc_forward(drug_features, protein_features, packed, n_output, *, tm=128):
    """drug_features/protein_features: [B, output_dim] f32; packed: prepare_params output."""
    B, D = drug_features.shape
    n_pad = packed["w4"].shape[1]

    # Row tile: MXU-friendly but no more than needed for small batches.
    tm = min(tm, 8 * (-(-B // 8)))
    b_pad = tm * (-(-B // tm))
    if b_pad != B:
        drug_features = jnp.pad(drug_features, ((0, b_pad - B), (0, 0)))
        protein_features = jnp.pad(protein_features, ((0, b_pad - B), (0, 0)))

    grid = (b_pad // tm,)

    def x_map(i):          # activation tiles march along the batch
        return (i, 0)

    def w_map(i):          # weights/biases: constant block -> VMEM resident
        return (0, 0)

    in_specs = [
        pl.BlockSpec((tm, D), x_map),                 # drug tile
        pl.BlockSpec((tm, D), x_map),                 # protein tile
        pl.BlockSpec(packed["w1d"].shape, w_map),
        pl.BlockSpec(packed["w1p"].shape, w_map),
        pl.BlockSpec(packed["b1"].shape, w_map),
        pl.BlockSpec(packed["w2"].shape, w_map),
        pl.BlockSpec(packed["b2"].shape, w_map),
        pl.BlockSpec(packed["w3"].shape, w_map),
        pl.BlockSpec(packed["b3"].shape, w_map),
        pl.BlockSpec(packed["w4"].shape, w_map),
        pl.BlockSpec(packed["b4"].shape, w_map),
    ]
    out_spec = pl.BlockSpec((tm, n_pad), x_map)

    weight_bytes = sum(int(packed[k].size) * packed[k].dtype.itemsize
                       for k in ("w1d", "w1p", "w2", "w3", "w4",
                                 "b1", "b2", "b3", "b4"))
    act_bytes = (2 * b_pad * D + b_pad * n_pad) * 4
    flops = 2 * b_pad * (2 * D * 1024 + 1024 * 512 + 512 * 256 + 256 * n_pad)

    out = pl.pallas_call(
        fc_kernel,
        out_shape=jax.ShapeDtypeStruct((b_pad, n_pad), jnp.float32),
        grid=grid,
        in_specs=in_specs,
        out_specs=out_spec,
        compiler_params=pltpu.CompilerParams(
            dimension_semantics=("parallel",)),
        cost_estimate=pl.CostEstimate(
            flops=flops, transcendentals=0,
            bytes_accessed=weight_bytes + act_bytes),
    )(drug_features, protein_features,
      packed["w1d"], packed["w1p"], packed["b1"],
      packed["w2"], packed["b2"],
      packed["w3"], packed["b3"],
      packed["w4"], packed["b4"])

    return out[:B, :n_output]


def init_params(key, output_dim, n_output):
    """Deterministic init matching the PyTorch layer shapes.
    PyTorch Linear(in, out) stores W as [out, in]; we store W^T = [in, out]."""
    dims = [(output_dim * 2, 1024), (1024, 512), (512, 256), (256, n_output)]
    params = {}
    for i, (din, dout) in enumerate(dims, start=1):
        key, kw, kb = jax.random.split(key, 3)
        bound = 1.0 / (din ** 0.5)  # same scale as torch.nn.Linear default
        params[f"w{i}"] = jax.random.uniform(
            kw, (din, dout), jnp.float32, minval=-bound, maxval=bound)
        params[f"b{i}"] = jax.random.uniform(
            kb, (1, dout), jnp.float32, minval=-bound, maxval=bound)
    return params


def reference_forward(drug_features, protein_features, params):
    """Pure-JAX reference with the same bf16-weight / f32-accumulate numerics."""
    def layer(x, w, b, relu):
        y = jnp.dot(x.astype(jnp.bfloat16), w.astype(jnp.bfloat16),
                    preferred_element_type=jnp.float32) + b
        return jnp.maximum(y, 0.0) if relu else y

    x = jnp.concatenate([drug_features, protein_features], axis=1)
    x = layer(x, params["w1"], params["b1"], True)
    x = layer(x, params["w2"], params["b2"], True)
    x = layer(x, params["w3"], params["b3"], True)
    return layer(x, params["w4"], params["b4"], False)


if __name__ == "__main__":
    output_dim = 32   # each feature branch has 32 dims -> combined = 64
    n_output = 1      # typical DTA regression head
    batch = 8

    key = jax.random.PRNGKey(0)
    key, kd, kp, kparams = jax.random.split(key, 4)
    drug = jax.random.normal(kd, (batch, output_dim), jnp.float32)
    prot = jax.random.normal(kp, (batch, output_dim), jnp.float32)

    params = init_params(kparams, output_dim, n_output)
    packed, n_out = prepare_params(params, output_dim)

    out = fc_forward(drug, prot, packed, n_out)
    out = jax.block_until_ready(out)

    ref = reference_forward(drug, prot, params)
    assert out.shape == (batch, n_output)
    assert bool(jnp.all(jnp.isfinite(out)))
    assert jnp.allclose(out, ref, atol=1e-2, rtol=1e-2)

    print("KERNEL_OK")
</pallas_src>

<mosaic_0001>
module attributes {stable_mosaic.version = 11 : i64} {
  func.func @fc_kernel(%arg0: i32, %arg1: memref<8x32xf32, #tpu.memory_space<vmem>>, %arg2: memref<8x32xf32, #tpu.memory_space<vmem>>, %arg3: memref<32x1024xbf16, #tpu.memory_space<vmem>>, %arg4: memref<32x1024xbf16, #tpu.memory_space<vmem>>, %arg5: memref<1x1024xf32, #tpu.memory_space<vmem>>, %arg6: memref<1024x512xbf16, #tpu.memory_space<vmem>>, %arg7: memref<1x512xf32, #tpu.memory_space<vmem>>, %arg8: memref<512x256xbf16, #tpu.memory_space<vmem>>, %arg9: memref<1x256xf32, #tpu.memory_space<vmem>>, %arg10: memref<256x128xbf16, #tpu.memory_space<vmem>>, %arg11: memref<1x128xf32, #tpu.memory_space<vmem>>, %arg12: memref<8x128xf32, #tpu.memory_space<vmem>>) attributes {dimension_semantics = [#tpu.dimension_semantics<parallel>], iteration_bounds = array<i64: 1>, scalar_prefetch = 0 : i64, scratch_operands = 0 : i64, tpu.core_type = #tpu.core_type<tc>, window_params = [{transform_indices = @transform_0, window_bounds = array<i64: 8, 32>}, {transform_indices = @transform_1, window_bounds = array<i64: 8, 32>}, {pipeline_mode = #tpu.pipeline_mode<synchronous>, transform_indices = @transform_2, window_bounds = array<i64: 32, 1024>}, {pipeline_mode = #tpu.pipeline_mode<synchronous>, transform_indices = @transform_3, window_bounds = array<i64: 32, 1024>}, {pipeline_mode = #tpu.pipeline_mode<synchronous>, transform_indices = @transform_4, window_bounds = array<i64: 1, 1024>}, {pipeline_mode = #tpu.pipeline_mode<synchronous>, transform_indices = @transform_5, window_bounds = array<i64: 1024, 512>}, {pipeline_mode = #tpu.pipeline_mode<synchronous>, transform_indices = @transform_6, window_bounds = array<i64: 1, 512>}, {pipeline_mode = #tpu.pipeline_mode<synchronous>, transform_indices = @transform_7, window_bounds = array<i64: 512, 256>}, {pipeline_mode = #tpu.pipeline_mode<synchronous>, transform_indices = @transform_8, window_bounds = array<i64: 1, 256>}, {pipeline_mode = #tpu.pipeline_mode<synchronous>, transform_indices = @transform_9, window_bounds = array<i64: 256, 128>}, {pipeline_mode = #tpu.pipeline_mode<synchronous>, transform_indices = @transform_10, window_bounds = array<i64: 1, 128>}, {transform_indices = @transform_11, window_bounds = array<i64: 8, 128>}]} {
    %c0 = arith.constant 0 : index
    %c0_0 = arith.constant 0 : index
    %0 = vector.load %arg1[%c0, %c0_0] : memref<8x32xf32, #tpu.memory_space<vmem>>, vector<8x32xf32>
    %1 = arith.truncf %0 : vector<8x32xf32> to vector<8x32xbf16>
    %c0_1 = arith.constant 0 : index
    %c0_2 = arith.constant 0 : index
    %2 = vector.load %arg2[%c0_1, %c0_2] : memref<8x32xf32, #tpu.memory_space<vmem>>, vector<8x32xf32>
    %3 = arith.truncf %2 : vector<8x32xf32> to vector<8x32xbf16>
    %c0_3 = arith.constant 0 : index
    %c0_4 = arith.constant 0 : index
    %4 = vector.load %arg3[%c0_3, %c0_4] : memref<32x1024xbf16, #tpu.memory_space<vmem>>, vector<32x1024xbf16>
    %cst = arith.constant dense<0.000000e+00> : vector<8x1024xf32>
    %5 = tpu.matmul %1, %4, %cst {dimension_numbers = #tpu.dot_dimension_numbers<[1], [0], [0], [1], [0, 0, 1, 1], [], []>} : vector<8x32xbf16>, vector<32x1024xbf16>, vector<8x1024xf32> -> vector<8x1024xf32>
    %c0_5 = arith.constant 0 : index
    %c0_6 = arith.constant 0 : index
    %6 = vector.load %arg4[%c0_5, %c0_6] : memref<32x1024xbf16, #tpu.memory_space<vmem>>, vector<32x1024xbf16>
    %cst_7 = arith.constant dense<0.000000e+00> : vector<8x1024xf32>
    %7 = tpu.matmul %3, %6, %cst_7 {dimension_numbers = #tpu.dot_dimension_numbers<[1], [0], [0], [1], [0, 0, 1, 1], [], []>} : vector<8x32xbf16>, vector<32x1024xbf16>, vector<8x1024xf32> -> vector<8x1024xf32>
    %8 = arith.addf %5, %7 : vector<8x1024xf32>
    %c0_8 = arith.constant 0 : index
    %c0_9 = arith.constant 0 : index
    %9 = vector.load %arg5[%c0_8, %c0_9] : memref<1x1024xf32, #tpu.memory_space<vmem>>, vector<1x1024xf32>
    %10 = vector.broadcast %9 : vector<1x1024xf32> to vector<8x1024xf32>
    %11 = arith.addf %8, %10 : vector<8x1024xf32>
    %cst_10 = arith.constant 0.000000e+00 : f32
    %12 = vector.broadcast %cst_10 : f32 to vector<8x1024xf32>
    %13 = arith.maximumf %11, %12 : vector<8x1024xf32>
    %14 = arith.truncf %13 : vector<8x1024xf32> to vector<8x1024xbf16>
    %c0_11 = arith.constant 0 : index
    %c0_12 = arith.constant 0 : index
    %15 = vector.load %arg6[%c0_11, %c0_12] : memref<1024x512xbf16, #tpu.memory_space<vmem>>, vector<1024x512xbf16>
    %cst_13 = arith.constant dense<0.000000e+00> : vector<8x512xf32>
    %16 = tpu.matmul %14, %15, %cst_13 {dimension_numbers = #tpu.dot_dimension_numbers<[1], [0], [0], [1], [0, 0, 1, 1], [], []>} : vector<8x1024xbf16>, vector<1024x512xbf16>, vector<8x512xf32> -> vector<8x512xf32>
    %c0_14 = arith.constant 0 : index
    %c0_15 = arith.constant 0 : index
    %17 = vector.load %arg7[%c0_14, %c0_15] : memref<1x512xf32, #tpu.memory_space<vmem>>, vector<1x512xf32>
    %18 = vector.broadcast %17 : vector<1x512xf32> to vector<8x512xf32>
    %19 = arith.addf %16, %18 : vector<8x512xf32>
    %cst_16 = arith.constant 0.000000e+00 : f32
    %20 = vector.broadcast %cst_16 : f32 to vector<8x512xf32>
    %21 = arith.maximumf %19, %20 : vector<8x512xf32>
    %22 = arith.truncf %21 : vector<8x512xf32> to vector<8x512xbf16>
    %c0_17 = arith.constant 0 : index
    %c0_18 = arith.constant 0 : index
    %23 = vector.load %arg8[%c0_17, %c0_18] : memref<512x256xbf16, #tpu.memory_space<vmem>>, vector<512x256xbf16>
    %cst_19 = arith.constant dense<0.000000e+00> : vector<8x256xf32>
    %24 = tpu.matmul %22, %23, %cst_19 {dimension_numbers = #tpu.dot_dimension_numbers<[1], [0], [0], [1], [0, 0, 1, 1], [], []>} : vector<8x512xbf16>, vector<512x256xbf16>, vector<8x256xf32> -> vector<8x256xf32>
    %c0_20 = arith.constant 0 : index
    %c0_21 = arith.constant 0 : index
    %25 = vector.load %arg9[%c0_20, %c0_21] : memref<1x256xf32, #tpu.memory_space<vmem>>, vector<1x256xf32>
    %26 = vector.broadcast %25 : vector<1x256xf32> to vector<8x256xf32>
    %27 = arith.addf %24, %26 : vector<8x256xf32>
    %cst_22 = arith.constant 0.000000e+00 : f32
    %28 = vector.broadcast %cst_22 : f32 to vector<8x256xf32>
    %29 = arith.maximumf %27, %28 : vector<8x256xf32>
    %30 = arith.truncf %29 : vector<8x256xf32> to vector<8x256xbf16>
    %c0_23 = arith.constant 0 : index
    %c0_24 = arith.constant 0 : index
    %31 = vector.load %arg10[%c0_23, %c0_24] : memref<256x128xbf16, #tpu.memory_space<vmem>>, vector<256x128xbf16>
    %cst_25 = arith.constant dense<0.000000e+00> : vector<8x128xf32>
    %32 = tpu.matmul %30, %31, %cst_25 {dimension_numbers = #tpu.dot_dimension_numbers<[1], [0], [0], [1], [0, 0, 1, 1], [], []>} : vector<8x256xbf16>, vector<256x128xbf16>, vector<8x128xf32> -> vector<8x128xf32>
    %c0_26 = arith.constant 0 : index
    %c0_27 = arith.constant 0 : index
    %33 = vector.load %arg11[%c0_26, %c0_27] : memref<1x128xf32, #tpu.memory_space<vmem>>, vector<1x128xf32>
    %34 = vector.broadcast %33 : vector<1x128xf32> to vector<8x128xf32>
    %35 = arith.addf %32, %34 : vector<8x128xf32>
    %c0_28 = arith.constant 0 : index
    %c0_29 = arith.constant 0 : index
    %36 = vector.load %arg12[%c0_28, %c0_29] : memref<8x128xf32, #tpu.memory_space<vmem>>, vector<8x128xf32>
    tpu.vector_store %arg12[%c0_28, %c0_29], %35 {strides = array<i32>} : memref<8x128xf32, #tpu.memory_space<vmem>>, vector<8x128xf32>,
    return
  }
  func.func @transform_0(%arg0: i32) -> (i32, i32) {
    %c0_i32 = arith.constant 0 : i32
    %c0_i32_0 = arith.constant 0 : i32
    return %arg0, %c0_i32 : i32, i32
  }
  func.func @transform_1(%arg0: i32) -> (i32, i32) {
    %c0_i32 = arith.constant 0 : i32
    %c0_i32_0 = arith.constant 0 : i32
    return %arg0, %c0_i32 : i32, i32
  }
  func.func @transform_2(%arg0: i32) -> (i32, i32) {
    %c0_i32 = arith.constant 0 : i32
    %c0_i32_0 = arith.constant 0 : i32
    %c0_i32_1 = arith.constant 0 : i32
    return %c0_i32, %c0_i32_0 : i32, i32
  }
  func.func @transform_3(%arg0: i32) -> (i32, i32) {
    %c0_i32 = arith.constant 0 : i32
    %c0_i32_0 = arith.constant 0 : i32
    %c0_i32_1 = arith.constant 0 : i32
    return %c0_i32, %c0_i32_0 : i32, i32
  }
  func.func @transform_4(%arg0: i32) -> (i32, i32) {
    %c0_i32 = arith.constant 0 : i32
    %c0_i32_0 = arith.constant 0 : i32
    %c0_i32_1 = arith.constant 0 : i32
    return %c0_i32, %c0_i32_0 : i32, i32
  }
  func.func @transform_5(%arg0: i32) -> (i32, i32) {
    %c0_i32 = arith.constant 0 : i32
    %c0_i32_0 = arith.constant 0 : i32
    %c0_i32_1 = arith.constant 0 : i32
    return %c0_i32, %c0_i32_0 : i32, i32
  }
  func.func @transform_6(%arg0: i32) -> (i32, i32) {
    %c0_i32 = arith.constant 0 : i32
    %c0_i32_0 = arith.constant 0 : i32
    %c0_i32_1 = arith.constant 0 : i32
    return %c0_i32, %c0_i32_0 : i32, i32
  }
  func.func @transform_7(%arg0: i32) -> (i32, i32) {
    %c0_i32 = arith.constant 0 : i32
    %c0_i32_0 = arith.constant 0 : i32
    %c0_i32_1 = arith.constant 0 : i32
    return %c0_i32, %c0_i32_0 : i32, i32
  }
  func.func @transform_8(%arg0: i32) -> (i32, i32) {
    %c0_i32 = arith.constant 0 : i32
    %c0_i32_0 = arith.constant 0 : i32
    %c0_i32_1 = arith.constant 0 : i32
    return %c0_i32, %c0_i32_0 : i32, i32
  }
  func.func @transform_9(%arg0: i32) -> (i32, i32) {
    %c0_i32 = arith.constant 0 : i32
    %c0_i32_0 = arith.constant 0 : i32
    %c0_i32_1 = arith.constant 0 : i32
    return %c0_i32, %c0_i32_0 : i32, i32
  }
  func.func @transform_10(%arg0: i32) -> (i32, i32) {
    %c0_i32 = arith.constant 0 : i32
    %c0_i32_0 = arith.constant 0 : i32
    %c0_i32_1 = arith.constant 0 : i32
    return %c0_i32, %c0_i32_0 : i32, i32
  }
  func.func @transform_11(%arg0: i32) -> (i32, i32) {
    %c0_i32 = arith.constant 0 : i32
    %c0_i32_0 = arith.constant 0 : i32
    return %arg0, %c0_i32 : i32, i32
  }
}

</mosaic_0001>

<llo_original>
// kernel: tpu_custom_call.1
$region0: #{tpu_custom_call.1}
  #allocation0 [shape = 'u32[]', space=smem, size = 0x4, offset = 0x4, fixed_abs, tag = 'smem constant byte address 0x4 - core index']
  #allocation1 [shape = 'u32[144,128]{1,0:T(1,128)}', space=vmem, size = 0x12000, scoped, tag = 'internal scratch']
  %s0 = inlined_call_operand.hbm [shape: f32[8,32], index: 0, kind: input, shape index: {}]
  %s1 = inlined_call_operand.hbm [shape: f32[8,32], index: 1, kind: input, shape index: {}]
  %s2 = inlined_call_operand.hbm [shape: bf16[32,1024], index: 2, kind: input, shape index: {}]
  %s3 = inlined_call_operand.hbm [shape: bf16[32,1024], index: 3, kind: input, shape index: {}]
  %s4 = inlined_call_operand.vmem [shape: f32[1,1024], index: 4, kind: input, shape index: {}]
  %s5 = inlined_call_operand.hbm [shape: bf16[1024,512], index: 5, kind: input, shape index: {}]
  %s6 = inlined_call_operand.vmem [shape: f32[1,512], index: 6, kind: input, shape index: {}]
  %s7 = inlined_call_operand.hbm [shape: bf16[512,256], index: 7, kind: input, shape index: {}]
  %s8 = inlined_call_operand.vmem [shape: f32[1,256], index: 8, kind: input, shape index: {}]
  %s9 = inlined_call_operand.hbm [shape: bf16[256,128], index: 9, kind: input, shape index: {}]
  %s10 = inlined_call_operand.vmem [shape: f32[1,128], index: 10, kind: input, shape index: {}]
  %s11 = inlined_call_operand.hbm [shape: f32[8,128], index: 11, kind: output, shape index: {}]
  %s12 = sld [smem:[#allocation0]]
  $region82: #{tpu_custom_call.1} parent=0
    _
  %s14 = ssub.s32 1, %s12
  %s15 = scalar_select 0, %s14, %s12
  $region1: #{tpu_custom_call.1} parent=0
    #allocation2 [shape = 'u8[4096]{0}', space=vmem, size = 0x1000, scoped, tag = 'input window, operand 0, single buffered']
    #allocation3 [shape = 's32[1]{0}', space=sflag, size = 0x4, scoped, tag = 'scoped memory for tpu_custom_call.1']
    #allocation4 [shape = 's32[1]{0}', space=sflag, size = 0x4, scoped, tag = 'scoped memory for tpu_custom_call.1']
    #allocation5 [shape = 'u8[4096]{0}', space=vmem, size = 0x1000, scoped, tag = 'input window, operand 1, single buffered']
    #allocation6 [shape = 's32[1]{0}', space=sflag, size = 0x4, scoped, tag = 'scoped memory for tpu_custom_call.1']
    #allocation7 [shape = 'u8[65536]{0}', space=vmem, size = 0x10000, scoped, tag = 'input window, operand 2, single buffered']
    #allocation8 [shape = 'u8[65536]{0}', space=vmem, size = 0x10000, scoped, tag = 'input window, operand 3, single buffered']
    #allocation9 [shape = 's32[1]{0}', space=sflag, size = 0x4, scoped, tag = 'scoped memory for tpu_custom_call.1']
    #allocation10 [shape = 'u8[1048576]{0}', space=vmem, size = 0x100000, scoped, tag = 'input window, operand 5, single buffered']
    #allocation11 [shape = 'u8[262144]{0}', space=vmem, size = 0x40000, scoped, tag = 'input window, operand 7, single buffered']
    #allocation12 [shape = 's32[1]{0}', space=sflag, size = 0x4, scoped, tag = 'scoped memory for tpu_custom_call.1']
    #allocation13 [shape = 'u8[65536]{0}', space=vmem, size = 0x10000, scoped, tag = 'input window, operand 9, single buffered']
    #allocation14 [shape = 'u8[4096]{0}', space=vmem, size = 0x1000, scoped, tag = 'output window, operand 0, single buffered']
    %16 = vsyncpa [#allocation3], 0
    %17 = vsyncpa [#allocation6], 0
    %18 = vsyncpa [#allocation9], 0
    %19 = vsyncpa [#allocation12], 0
    %20 = vsyncpa [#allocation4], 0
    // Predicated region
    $region2: #{tpu_custom_call.1} parent=1 // pred_check
      _
    $region3: #{tpu_custom_call.1} parent=1 // pred_check_branch
      %22 = sbr.rel (0) target = $region5
    $region4: #{tpu_custom_call.1} parent=1 // pred_region
      %s24 = ssub.s32 128, 128
      %25 = vsyncadd [#allocation3], %s24
      %s27 = sshll.u32 [#allocation2], 4
      %s28 = int_to_ptr.vmem [resolvable:$true] %s27
      %30 = dma.hbm_to_vmem [thread:$0]  %s0, 128, %s28, [#allocation3]
    $region5: #{tpu_custom_call.1} parent=1 // pred_fallthru
      _
    // Predicated region
    $region6: #{tpu_custom_call.1} parent=1 // pred_check
      _
    $region7: #{tpu_custom_call.1} parent=1 // pred_check_branch
      %32 = sbr.rel (0) target = $region9
    $region8: #{tpu_custom_call.1} parent=1 // pred_region
      %s34 = ssub.s32 128, 128
      %35 = vsyncadd [#allocation6], %s34
      %s37 = sshll.u32 [#allocation5], 4
      %s38 = int_to_ptr.vmem [resolvable:$true] %s37
      %40 = dma.hbm_to_vmem [thread:$0]  %s1, 128, %s38, [#allocation6]
    $region9: #{tpu_custom_call.1} parent=1 // pred_fallthru
      _
    // Predicated region
    $region10: #{tpu_custom_call.1} parent=1 // pred_check
      _
    $region11: #{tpu_custom_call.1} parent=1 // pred_check_branch
      %42 = sbr.rel (0) target = $region13
    $region12: #{tpu_custom_call.1} parent=1 // pred_region
      %s44 = ssub.s32 2048, 2048
      %45 = vsyncadd [#allocation6], %s44
      %s46 = sshll.u32 [#allocation7], 4
      %s47 = int_to_ptr.vmem [resolvable:$true] %s46
      %52 = dma.hbm_to_vmem [thread:$0]  %s2, 2048, %s47, [#allocation6], 512, 512, 32
    $region13: #{tpu_custom_call.1} parent=1 // pred_fallthru
      _
    // Predicated region
    $region14: #{tpu_custom_call.1} parent=1 // pred_check
      _
    $region15: #{tpu_custom_call.1} parent=1 // pred_check_branch
      %54 = sbr.rel (0) target = $region17
    $region16: #{tpu_custom_call.1} parent=1 // pred_region
      %s56 = ssub.s32 2048, 2048
      %57 = vsyncadd [#allocation9], %s56
      %s58 = sshll.u32 [#allocation8], 4
      %s59 = int_to_ptr.vmem [resolvable:$true] %s58
      %64 = dma.hbm_to_vmem [thread:$0]  %s3, 2048, %s59, [#allocation9], 512, 512, 32
    $region17: #{tpu_custom_call.1} parent=1 // pred_fallthru
      _
    // Predicated region
    $region18: #{tpu_custom_call.1} parent=1 // pred_check
      _
    $region19: #{tpu_custom_call.1} parent=1 // pred_check_branch
      %66 = sbr.rel (0) target = $region21
    $region20: #{tpu_custom_call.1} parent=1 // pred_region
      _
    $region21: #{tpu_custom_call.1} parent=1 // pred_fallthru
      _
    // Predicated region
    $region22: #{tpu_custom_call.1} parent=1 // pred_check
      _
    $region23: #{tpu_custom_call.1} parent=1 // pred_check_branch
      %68 = sbr.rel (0) target = $region25
    $region24: #{tpu_custom_call.1} parent=1 // pred_region
      %s70 = ssub.s32 32768, 32768
      %71 = vsyncadd [#allocation9], %s70
      %s72 = sshll.u32 [#allocation10], 4
      %s73 = int_to_ptr.vmem [resolvable:$true] %s72
      %78 = dma.hbm_to_vmem [thread:$0]  %s5, 32768, %s73, [#allocation9], 256, 256, 16
    $region25: #{tpu_custom_call.1} parent=1 // pred_fallthru
      _
    // Predicated region
    $region26: #{tpu_custom_call.1} parent=1 // pred_check
      _
    $region27: #{tpu_custom_call.1} parent=1 // pred_check_branch
      %80 = sbr.rel (0) target = $region29
    $region28: #{tpu_custom_call.1} parent=1 // pred_region
      _
    $region29: #{tpu_custom_call.1} parent=1 // pred_fallthru
      _
    // Predicated region
    $region30: #{tpu_custom_call.1} parent=1 // pred_check
      _
    $region31: #{tpu_custom_call.1} parent=1 // pred_check_branch
      %82 = sbr.rel (0) target = $region33
    $region32: #{tpu_custom_call.1} parent=1 // pred_region
      %s84 = ssub.s32 8192, 8192
      %85 = vsyncadd [#allocation12], %s84
      %s86 = sshll.u32 [#allocation11], 4
      %s87 = int_to_ptr.vmem [resolvable:$true] %s86
      %92 = dma.hbm_to_vmem [thread:$0]  %s7, 8192, %s87, [#allocation12], 128, 128, 8
    $region33: #{tpu_custom_call.1} parent=1 // pred_fallthru
      _
    // Predicated region
    $region34: #{tpu_custom_call.1} parent=1 // pred_check
      _
    $region35: #{tpu_custom_call.1} parent=1 // pred_check_branch
      %94 = sbr.rel (0) target = $region37
    $region36: #{tpu_custom_call.1} parent=1 // pred_region
      _
    $region37: #{tpu_custom_call.1} parent=1 // pred_fallthru
      _
    // Predicated region
    $region38: #{tpu_custom_call.1} parent=1 // pred_check
      _
    $region39: #{tpu_custom_call.1} parent=1 // pred_check_branch
      %96 = sbr.rel (0) target = $region41
    $region40: #{tpu_custom_call.1} parent=1 // pred_region
      %s98 = ssub.s32 2048, 2048
      %99 = vsyncadd [#allocation12], %s98
      %s100 = sshll.u32 [#allocation13], 4
      %s101 = int_to_ptr.vmem [resolvable:$true] %s100
      %106 = dma.hbm_to_vmem [thread:$0]  %s9, 2048, %s101, [#allocation12], 64, 64, 4
    $region41: #{tpu_custom_call.1} parent=1 // pred_fallthru
      _
    // Predicated region
    $region42: #{tpu_custom_call.1} parent=1 // pred_check
      _
    $region43: #{tpu_custom_call.1} parent=1 // pred_check_branch
      %108 = sbr.rel (0) target = $region45
    $region44: #{tpu_custom_call.1} parent=1 // pred_region
      _
    $region45: #{tpu_custom_call.1} parent=1 // pred_fallthru
      _
    // Predicated region
    $region46: #{tpu_custom_call.1} parent=1 // pred_check
      _
    $region47: #{tpu_custom_call.1} parent=1 // pred_check_branch
      %110 = sbr.rel (0) target = $region49
    $region48: #{tpu_custom_call.1} parent=1 // pred_region
      %111 = dma.done [#allocation3], 128
    $region49: #{tpu_custom_call.1} parent=1 // pred_fallthru
      _
    // Predicated region
    $region50: #{tpu_custom_call.1} parent=1 // pred_check
      _
    $region51: #{tpu_custom_call.1} parent=1 // pred_check_branch
      %113 = sbr.rel (0) target = $region53
    $region52: #{tpu_custom_call.1} parent=1 // pred_region
      %114 = dma.done [#allocation6], 128
    $region53: #{tpu_custom_call.1} parent=1 // pred_fallthru
      _
    // Predicated region
    $region54: #{tpu_custom_call.1} parent=1 // pred_check
      _
    $region55: #{tpu_custom_call.1} parent=1 // pred_check_branch
      %116 = sbr.rel (0) target = $region57
    $region56: #{tpu_custom_call.1} parent=1 // pred_region
      %117 = dma.done [#allocation6], 2048
    $region57: #{tpu_custom_call.1} parent=1 // pred_fallthru
      _
    // Predicated region
    $region58: #{tpu_custom_call.1} parent=1 // pred_check
      _
    $region59: #{tpu_custom_call.1} parent=1 // pred_check_branch
      %119 = sbr.rel (0) target = $region61
    $region60: #{tpu_custom_call.1} parent=1 // pred_region
      %120 = dma.done [#allocation9], 2048
    $region61: #{tpu_custom_call.1} parent=1 // pred_fallthru
      _
    // Predicated region
    $region62: #{tpu_custom_call.1} parent=1 // pred_check
      _
    $region63: #{tpu_custom_call.1} parent=1 // pred_check_branch
      %122 = sbr.rel (0) target = $region65
    $region64: #{tpu_custom_call.1} parent=1 // pred_region
      %123 = dma.done [#allocation9], 32768
    $region65: #{tpu_custom_call.1} parent=1 // pred_fallthru
      _
    // Predicated region
    $region66: #{tpu_custom_call.1} parent=1 // pred_check
      _
    $region67: #{tpu_custom_call.1} parent=1 // pred_check_branch
      %125 = sbr.rel (0) target = $region69
    $region68: #{tpu_custom_call.1} parent=1 // pred_region
      %126 = dma.done [#allocation12], 8192
    $region69: #{tpu_custom_call.1} parent=1 // pred_fallthru
      _
    // Predicated region
    $region70: #{tpu_custom_call.1} parent=1 // pred_check
      _
    $region71: #{tpu_custom_call.1} parent=1 // pred_check_branch
      %128 = sbr.rel (0) target = $region73
    $region72: #{tpu_custom_call.1} parent=1 // pred_region
      %129 = dma.done [#allocation12], 2048
    $region73: #{tpu_custom_call.1} parent=1 // pred_fallthru
      _
    %v131 = vld [vmem:[#allocation2] sm:$0xff]
    %v132 = vpack.c.bf16 %v131, %v131
    %v133 = vld [vmem:[#allocation5] sm:$0xff]
    %v134 = vpack.c.bf16 %v133, %v133
    %v135 = vld [vmem:[#allocation7] sm:$0xff]
    %v136 = vld [vmem:[#allocation7 + $0x8] sm:$0xff]
    %v137 = vld [vmem:[#allocation7 + $0x10] sm:$0xff]
    %v138 = vld [vmem:[#allocation7 + $0x18] sm:$0xff]
    %v139 = vld [vmem:[#allocation7 + $0x20] sm:$0xff]
    %v140 = vld [vmem:[#allocation7 + $0x28] sm:$0xff]
    %v141 = vld [vmem:[#allocation7 + $0x30] sm:$0xff]
    %v142 = vld [vmem:[#allocation7 + $0x38] sm:$0xff]
    %v143 = vld [vmem:[#allocation7 + $0x40] sm:$0xff]
    %v144 = vld [vmem:[#allocation7 + $0x48] sm:$0xff]
    %v145 = vld [vmem:[#allocation7 + $0x50] sm:$0xff]
    %v146 = vld [vmem:[#allocation7 + $0x58] sm:$0xff]
    %v147 = vld [vmem:[#allocation7 + $0x60] sm:$0xff]
    %v148 = vld [vmem:[#allocation7 + $0x68] sm:$0xff]
    %v149 = vld [vmem:[#allocation7 + $0x70] sm:$0xff]
    %v150 = vld [vmem:[#allocation7 + $0x78] sm:$0xff]
    %v151 = vld [vmem:[#allocation8] sm:$0xff]
    %v152 = vld [vmem:[#allocation8 + $0x8] sm:$0xff]
    %v153 = vld [vmem:[#allocation8 + $0x10] sm:$0xff]
    %v154 = vld [vmem:[#allocation8 + $0x18] sm:$0xff]
    %v155 = vld [vmem:[#allocation8 + $0x20] sm:$0xff]
    %v156 = vld [vmem:[#allocation8 + $0x28] sm:$0xff]
    %v157 = vld [vmem:[#allocation8 + $0x30] sm:$0xff]
    %v158 = vld [vmem:[#allocation8 + $0x38] sm:$0xff]
    %v159 = vld [vmem:[#allocation8 + $0x40] sm:$0xff]
    %v160 = vld [vmem:[#allocation8 + $0x48] sm:$0xff]
    %v161 = vld [vmem:[#allocation8 + $0x50] sm:$0xff]
    %v162 = vld [vmem:[#allocation8 + $0x58] sm:$0xff]
    %v163 = vld [vmem:[#allocation8 + $0x60] sm:$0xff]
    %v164 = vld [vmem:[#allocation8 + $0x68] sm:$0xff]
    %v165 = vld [vmem:[#allocation8 + $0x70] sm:$0xff]
    %v166 = vld [vmem:[#allocation8 + $0x78] sm:$0xff]
    %v183 = vunpack.c.l.b16 %v151
    %v184 = vunpack.c.h.b16 %v151
    %v185 = vunpack.c.l.b16 %v152
    %v186 = vunpack.c.h.b16 %v152
    %v187 = vunpack.c.l.b16 %v153
    %v188 = vunpack.c.h.b16 %v153
    %v189 = vunpack.c.l.b16 %v154
    %v190 = vunpack.c.h.b16 %v154
    %v191 = vunpack.c.l.b16 %v155
    %v192 = vunpack.c.h.b16 %v155
    %v193 = vunpack.c.l.b16 %v156
    %v194 = vunpack.c.h.b16 %v156
    %v195 = vunpack.c.l.b16 %v157
    %v196 = vunpack.c.h.b16 %v157
    %v197 = vunpack.c.l.b16 %v158
    %v198 = vunpack.c.h.b16 %v158
    %v199 = vunpack.c.l.b16 %v159
    %v200 = vunpack.c.h.b16 %v159
    %v201 = vunpack.c.l.b16 %v160
    %v202 = vunpack.c.h.b16 %v160
    %v203 = vunpack.c.l.b16 %v161
    %v204 = vunpack.c.h.b16 %v161
    %v205 = vunpack.c.l.b16 %v162
    %v206 = vunpack.c.h.b16 %v162
    %v207 = vunpack.c.l.b16 %v163
    %v208 = vunpack.c.h.b16 %v163
    %v209 = vunpack.c.l.b16 %v164
    %v210 = vunpack.c.h.b16 %v164
    %v211 = vunpack.c.l.b16 %v165
    %v212 = vunpack.c.h.b16 %v165
    %v213 = vunpack.c.l.b16 %v166
    %v214 = vunpack.c.h.b16 %v166
    %v215 = vpack.c.b16 %v191, %v183
    %v216 = vpack.c.b16 %v192, %v184
    %v217 = vpack.c.b16 %v193, %v185
    %v218 = vpack.c.b16 %v194, %v186
    %v219 = vpack.c.b16 %v195, %v187
    %v220 = vpack.c.b16 %v196, %v188
    %v221 = vpack.c.b16 %v197, %v189
    %v222 = vpack.c.b16 %v198, %v190
    %v223 = vpack.c.b16 %v207, %v199
    %v224 = vpack.c.b16 %v208, %v200
    %v225 = vpack.c.b16 %v209, %v201
    %v226 = vpack.c.b16 %v210, %v202
    %v227 = vpack.c.b16 %v211, %v203
    %v228 = vpack.c.b16 %v212, %v204
    %v229 = vpack.c.b16 %v213, %v205
    %v230 = vpack.c.b16 %v214, %v206
    %vm247 = vcmask 261120
    %v249 = vsel %vm247, %v134, 0
    %251 = vmatprep.subr.bf16.mxu0 %v216
    %252 = vmatpush1.bf16.msra.mxu0 %v215
    %253 = vmatprep.subr.bf16.mxu0 %v224
    %254 = vmatpush1.bf16.msra.mxu0 %v223
    %255 = vmatprep.subr.bf16.mxu0 0
    %256 = vmatpush1.bf16.msra.mxu0 0
    %257 = vmatprep.subr.bf16.mxu0 0
    %258 = vmatpush1.bf16.msra.mxu0 0
    %259 = vmatprep.subr.bf16.mxu0 0
    %260 = vmatpush1.bf16.msra.mxu0 0
    %261 = vmatprep.subr.bf16.mxu0 0
    %262 = vmatpush1.bf16.msra.mxu0 0
    %263 = vmatprep.subr.bf16.mxu0 0
    %264 = vmatpush1.bf16.msra.mxu0 0
    %265 = vmatprep.subr.bf16.mxu0 0
    %266 = vmatpush1.bf16.msra.mxu0 0
    %267 = vmatprep.subr.bf16.mxu0 0
    %268 = vmatpush1.bf16.msra.mxu0 0
    %269 = vmatprep.subr.bf16.mxu0 0
    %270 = vmatpush1.bf16.msra.mxu0 0
    %271 = vmatprep.subr.bf16.mxu0 0
    %272 = vmatpush1.bf16.msra.mxu0 0
    %273 = vmatprep.subr.bf16.mxu0 0
    %274 = vmatpush1.bf16.msra.mxu0 0
    %275 = vmatprep.subr.bf16.mxu0 0
    %276 = vmatpush1.bf16.msra.mxu0 0
    %277 = vmatprep.subr.bf16.mxu0 0
    %278 = vmatpush1.bf16.msra.mxu0 0
    %279 = vmatprep.subr.bf16.mxu0 0
    %280 = vmatpush1.bf16.msra.mxu0 0
    %281 = vmatprep.subr.bf16.mxu0 0
    %282 = vmatpush1.bf16.msra.mxu0 0
    %283 = vmatprep.mubr.bf16.mxu0 0
    %284 = vmatmul.mubr.bf16.gmra.mrb[0].mxu0 %v249
    %v285 = vpop.f32.mrb[0].mxu0
    %v286 = vadd.f32 0.0, %v285
    %v287 = vpop.f32.mrb[0].mxu0
    %v288 = vadd.f32 0.0, %v287
    %v289 = vpop.f32.mrb[0].mxu0
    %v290 = vpop.f32.mrb[0].mxu0
    %291 = vdwg.mxu0
    %292 = vmatprep.subr.bf16.mxu0 %v218
    %293 = vmatpush1.bf16.msra.mxu0 %v217
    %294 = vmatprep.subr.bf16.mxu0 %v226
    %295 = vmatpush1.bf16.msra.mxu0 %v225
    %296 = vmatprep.subr.bf16.mxu0 0
    %297 = vmatpush1.bf16.msra.mxu0 0
    %298 = vmatprep.subr.bf16.mxu0 0
    %299 = vmatpush1.bf16.msra.mxu0 0
    %300 = vmatprep.subr.bf16.mxu0 0
    %301 = vmatpush1.bf16.msra.mxu0 0
    %302 = vmatprep.subr.bf16.mxu0 0
    %303 = vmatpush1.bf16.msra.mxu0 0
    %304 = vmatprep.subr.bf16.mxu0 0
    %305 = vmatpush1.bf16.msra.mxu0 0
    %306 = vmatprep.subr.bf16.mxu0 0
    %307 = vmatpush1.bf16.msra.mxu0 0
    %308 = vmatprep.subr.bf16.mxu0 0
    %309 = vmatpush1.bf16.msra.mxu0 0
    %310 = vmatprep.subr.bf16.mxu0 0
    %311 = vmatpush1.bf16.msra.mxu0 0
    %312 = vmatprep.subr.bf16.mxu0 0
    %313 = vmatpush1.bf16.msra.mxu0 0
    %314 = vmatprep.subr.bf16.mxu0 0
    %315 = vmatpush1.bf16.msra.mxu0 0
    %316 = vmatprep.subr.bf16.mxu0 0
    %317 = vmatpush1.bf16.msra.mxu0 0
    %318 = vmatprep.subr.bf16.mxu0 0
    %319 = vmatpush1.bf16.msra.mxu0 0
    %320 = vmatprep.subr.bf16.mxu0 0
    %321 = vmatpush1.bf16.msra.mxu0 0
    %322 = vmatprep.subr.bf16.mxu0 0
    %323 = vmatpush1.bf16.msra.mxu0 0
    %324 = vmatprep.mubr.bf16.mxu0 0
    %325 = vmatmul.mubr.bf16.gmra.mrb[0].mxu0 %v249
    %v326 = vpop.f32.mrb[0].mxu0
    %v327 = vadd.f32 0.0, %v326
    %v328 = vpop.f32.mrb[0].mxu0
    %v329 = vadd.f32 0.0, %v328
    %v330 = vpop.f32.mrb[0].mxu0
    %v331 = vpop.f32.mrb[0].mxu0
    %332 = vdwg.mxu0
    %333 = vmatprep.subr.bf16.mxu0 %v220
    %334 = vmatpush1.bf16.msra.mxu0 %v219
    %335 = vmatprep.subr.bf16.mxu0 %v228
    %336 = vmatpush1.bf16.msra.mxu0 %v227
    %337 = vmatprep.subr.bf16.mxu0 0
    %338 = vmatpush1.bf16.msra.mxu0 0
    %339 = vmatprep.subr.bf16.mxu0 0
    %340 = vmatpush1.bf16.msra.mxu0 0
    %341 = vmatprep.subr.bf16.mxu0 0
    %342 = vmatpush1.bf16.msra.mxu0 0
    %343 = vmatprep.subr.bf16.mxu0 0
    %344 = vmatpush1.bf16.msra.mxu0 0
    %345 = vmatprep.subr.bf16.mxu0 0
    %346 = vmatpush1.bf16.msra.mxu0 0
    %347 = vmatprep.subr.bf16.mxu0 0
    %348 = vmatpush1.bf16.msra.mxu0 0
    %349 = vmatprep.subr.bf16.mxu0 0
    %350 = vmatpush1.bf16.msra.mxu0 0
    %351 = vmatprep.subr.bf16.mxu0 0
    %352 = vmatpush1.bf16.msra.mxu0 0
    %353 = vmatprep.subr.bf16.mxu0 0
    %354 = vmatpush1.bf16.msra.mxu0 0
    %355 = vmatprep.subr.bf16.mxu0 0
    %356 = vmatpush1.bf16.msra.mxu0 0
    %357 = vmatprep.subr.bf16.mxu0 0
    %358 = vmatpush1.bf16.msra.mxu0 0
    %359 = vmatprep.subr.bf16.mxu0 0
    %360 = vmatpush1.bf16.msra.mxu0 0
    %361 = vmatprep.subr.bf16.mxu0 0
    %362 = vmatpush1.bf16.msra.mxu0 0
    %363 = vmatprep.subr.bf16.mxu0 0
    %364 = vmatpush1.bf16.msra.mxu0 0
    %365 = vmatprep.mubr.bf16.mxu0 0
    %366 = vmatmul.mubr.bf16.gmra.mrb[0].mxu0 %v249
    %v367 = vpop.f32.mrb[0].mxu0
    %v368 = vadd.f32 0.0, %v367
    %v369 = vpop.f32.mrb[0].mxu0
    %v370 = vadd.f32 0.0, %v369
    %v371 = vpop.f32.mrb[0].mxu0
    %v372 = vpop.f32.mrb[0].mxu0
    %373 = vdwg.mxu0
    %374 = vmatprep.subr.bf16.mxu0 %v222
    %375 = vmatpush1.bf16.msra.mxu0 %v221
    %376 = vmatprep.subr.bf16.mxu0 %v230
    %377 = vmatpush1.bf16.msra.mxu0 %v229
    %378 = vmatprep.subr.bf16.mxu0 0
    %379 = vmatpush1.bf16.msra.mxu0 0
    %380 = vmatprep.subr.bf16.mxu0 0
    %381 = vmatpush1.bf16.msra.mxu0 0
    %382 = vmatprep.subr.bf16.mxu0 0
    %383 = vmatpush1.bf16.msra.mxu0 0
    %384 = vmatprep.subr.bf16.mxu0 0
    %385 = vmatpush1.bf16.msra.mxu0 0
    %386 = vmatprep.subr.bf16.mxu0 0
    %387 = vmatpush1.bf16.msra.mxu0 0
    %388 = vmatprep.subr.bf16.mxu0 0
    %389 = vmatpush1.bf16.msra.mxu0 0
    %390 = vmatprep.subr.bf16.mxu0 0
    %391 = vmatpush1.bf16.msra.mxu0 0
    %392 = vmatprep.subr.bf16.mxu0 0
    %393 = vmatpush1.bf16.msra.mxu0 0
    %394 = vmatprep.subr.bf16.mxu0 0
    %395 = vmatpush1.bf16.msra.mxu0 0
    %396 = vmatprep.subr.bf16.mxu0 0
    %397 = vmatpush1.bf16.msra.mxu0 0
    %398 = vmatprep.subr.bf16.mxu0 0
    %399 = vmatpush1.bf16.msra.mxu0 0
    %400 = vmatprep.subr.bf16.mxu0 0
    %401 = vmatpush1.bf16.msra.mxu0 0
    %402 = vmatprep.subr.bf16.mxu0 0
    %403 = vmatpush1.bf16.msra.mxu0 0
    %404 = vmatprep.subr.bf16.mxu0 0
    %405 = vmatpush1.bf16.msra.mxu0 0
    %406 = vmatprep.mubr.bf16.mxu0 0
    %407 = vmatmul.mubr.bf16.gmra.mrb[0].mxu0 %v249
    %v408 = vpop.f32.mrb[0].mxu0
    %v409 = vadd.f32 0.0, %v408
    %v410 = vpop.f32.mrb[0].mxu0
    %v411 = vadd.f32 0.0, %v410
    %v412 = vpop.f32.mrb[0].mxu0
    %v413 = vpop.f32.mrb[0].mxu0
    %414 = vdwg.mxu0
    %v431 = vunpack.c.l.b16 %v135
    %v432 = vunpack.c.h.b16 %v135
    %v433 = vunpack.c.l.b16 %v136
    %v434 = vunpack.c.h.b16 %v136
    %v435 = vunpack.c.l.b16 %v137
    %v436 = vunpack.c.h.b16 %v137
    %v437 = vunpack.c.l.b16 %v138
    %v438 = vunpack.c.h.b16 %v138
    %v439 = vunpack.c.l.b16 %v139
    %v440 = vunpack.c.h.b16 %v139
    %v441 = vunpack.c.l.b16 %v140
    %v442 = vunpack.c.h.b16 %v140
    %v443 = vunpack.c.l.b16 %v141
    %v444 = vunpack.c.h.b16 %v141
    %v445 = vunpack.c.l.b16 %v142
    %v446 = vunpack.c.h.b16 %v142
    %v447 = vunpack.c.l.b16 %v143
    %v448 = vunpack.c.h.b16 %v143
    %v449 = vunpack.c.l.b16 %v144
    %v450 = vunpack.c.h.b16 %v144
    %v451 = vunpack.c.l.b16 %v145
    %v452 = vunpack.c.h.b16 %v145
    %v453 = vunpack.c.l.b16 %v146
    %v454 = vunpack.c.h.b16 %v146
    %v455 = vunpack.c.l.b16 %v147
    %v456 = vunpack.c.h.b16 %v147
    %v457 = vunpack.c.l.b16 %v148
    %v458 = vunpack.c.h.b16 %v148
    %v459 = vunpack.c.l.b16 %v149
    %v460 = vunpack.c.h.b16 %v149
    %v461 = vunpack.c.l.b16 %v150
    %v462 = vunpack.c.h.b16 %v150
    %v463 = vpack.c.b16 %v439, %v431
    %v464 = vpack.c.b16 %v440, %v432
    %v465 = vpack.c.b16 %v441, %v433
    %v466 = vpack.c.b16 %v442, %v434
    %v467 = vpack.c.b16 %v443, %v435
    %v468 = vpack.c.b16 %v444, %v436
    %v469 = vpack.c.b16 %v445, %v437
    %v470 = vpack.c.b16 %v446, %v438
    %v471 = vpack.c.b16 %v455, %v447
    %v472 = vpack.c.b16 %v456, %v448
    %v473 = vpack.c.b16 %v457, %v449
    %v474 = vpack.c.b16 %v458, %v450
    %v475 = vpack.c.b16 %v459, %v451
    %v476 = vpack.c.b16 %v460, %v452
    %v477 = vpack.c.b16 %v461, %v453
    %v478 = vpack.c.b16 %v462, %v454
    %v496 = vsel %vm247, %v132, 0
    %498 = vmatprep.subr.bf16.mxu0 %v464
    %499 = vmatpush1.bf16.msra.mxu0 %v463
    %500 = vmatprep.subr.bf16.mxu0 %v472
    %501 = vmatpush1.bf16.msra.mxu0 %v471
    %502 = vmatprep.subr.bf16.mxu0 0
    %503 = vmatpush1.bf16.msra.mxu0 0
    %504 = vmatprep.subr.bf16.mxu0 0
    %505 = vmatpush1.bf16.msra.mxu0 0
    %506 = vmatprep.subr.bf16.mxu0 0
    %507 = vmatpush1.bf16.msra.mxu0 0
    %508 = vmatprep.subr.bf16.mxu0 0
    %509 = vmatpush1.bf16.msra.mxu0 0
    %510 = vmatprep.subr.bf16.mxu0 0
    %511 = vmatpush1.bf16.msra.mxu0 0
    %512 = vmatprep.subr.bf16.mxu0 0
    %513 = vmatpush1.bf16.msra.mxu0 0
    %514 = vmatprep.subr.bf16.mxu0 0
    %515 = vmatpush1.bf16.msra.mxu0 0
    %516 = vmatprep.subr.bf16.mxu0 0
    %517 = vmatpush1.bf16.msra.mxu0 0
    %518 = vmatprep.subr.bf16.mxu0 0
    %519 = vmatpush1.bf16.msra.mxu0 0
    %520 = vmatprep.subr.bf16.mxu0 0
    %521 = vmatpush1.bf16.msra.mxu0 0
    %522 = vmatprep.subr.bf16.mxu0 0
    %523 = vmatpush1.bf16.msra.mxu0 0
    %524 = vmatprep.subr.bf16.mxu0 0
    %525 = vmatpush1.bf16.msra.mxu0 0
    %526 = vmatprep.subr.bf16.mxu0 0
    %527 = vmatpush1.bf16.msra.mxu0 0
    %528 = vmatprep.subr.bf16.mxu0 0
    %529 = vmatpush1.bf16.msra.mxu0 0
    %530 = vmatprep.mubr.bf16.mxu0 0
    %531 = vmatmul.mubr.bf16.gmra.mrb[0].mxu0 %v496
    %v532 = vpop.f32.mrb[0].mxu0
    %v533 = vadd.f32 %v286, %v532
    %v534 = vpop.f32.mrb[0].mxu0
    %v535 = vadd.f32 %v288, %v534
    %v536 = vpop.f32.mrb[0].mxu0
    %v537 = vpop.f32.mrb[0].mxu0
    %538 = vdwg.mxu0
    %539 = vmatprep.subr.bf16.mxu0 %v466
    %540 = vmatpush1.bf16.msra.mxu0 %v465
    %541 = vmatprep.subr.bf16.mxu0 %v474
    %542 = vmatpush1.bf16.msra.mxu0 %v473
    %543 = vmatprep.subr.bf16.mxu0 0
    %544 = vmatpush1.bf16.msra.mxu0 0
    %545 = vmatprep.subr.bf16.mxu0 0
    %546 = vmatpush1.bf16.msra.mxu0 0
    %547 = vmatprep.subr.bf16.mxu0 0
    %548 = vmatpush1.bf16.msra.mxu0 0
    %549 = vmatprep.subr.bf16.mxu0 0
    %550 = vmatpush1.bf16.msra.mxu0 0
    %551 = vmatprep.subr.bf16.mxu0 0
    %552 = vmatpush1.bf16.msra.mxu0 0
    %553 = vmatprep.subr.bf16.mxu0 0
    %554 = vmatpush1.bf16.msra.mxu0 0
    %555 = vmatprep.subr.bf16.mxu0 0
    %556 = vmatpush1.bf16.msra.mxu0 0
    %557 = vmatprep.subr.bf16.mxu0 0
    %558 = vmatpush1.bf16.msra.mxu0 0
    %559 = vmatprep.subr.bf16.mxu0 0
    %560 = vmatpush1.bf16.msra.mxu0 0
    %561 = vmatprep.subr.bf16.mxu0 0
    %562 = vmatpush1.bf16.msra.mxu0 0
    %563 = vmatprep.subr.bf16.mxu0 0
    %564 = vmatpush1.bf16.msra.mxu0 0
    %565 = vmatprep.subr.bf16.mxu0 0
    %566 = vmatpush1.bf16.msra.mxu0 0
    %567 = vmatprep.subr.bf16.mxu0 0
    %568 = vmatpush1.bf16.msra.mxu0 0
    %569 = vmatprep.subr.bf16.mxu0 0
    %570 = vmatpush1.bf16.msra.mxu0 0
    %571 = vmatprep.mubr.bf16.mxu0 0
    %572 = vmatmul.mubr.bf16.gmra.mrb[0].mxu0 %v496
    %v573 = vpop.f32.mrb[0].mxu0
    %v574 = vadd.f32 %v327, %v573
    %v575 = vpop.f32.mrb[0].mxu0
    %v576 = vadd.f32 %v329, %v575
    %v577 = vpop.f32.mrb[0].mxu0
    %v578 = vpop.f32.mrb[0].mxu0
    %579 = vdwg.mxu0
    %580 = vmatprep.subr.bf16.mxu0 %v468
    %581 = vmatpush1.bf16.msra.mxu0 %v467
    %582 = vmatprep.subr.bf16.mxu0 %v476
    %583 = vmatpush1.bf16.msra.mxu0 %v475
    %584 = vmatprep.subr.bf16.mxu0 0
    %585 = vmatpush1.bf16.msra.mxu0 0
    %586 = vmatprep.subr.bf16.mxu0 0
    %587 = vmatpush1.bf16.msra.mxu0 0
    %588 = vmatprep.subr.bf16.mxu0 0
    %589 = vmatpush1.bf16.msra.mxu0 0
    %590 = vmatprep.subr.bf16.mxu0 0
    %591 = vmatpush1.bf16.msra.mxu0 0
    %592 = vmatprep.subr.bf16.mxu0 0
    %593 = vmatpush1.bf16.msra.mxu0 0
    %594 = vmatprep.subr.bf16.mxu0 0
    %595 = vmatpush1.bf16.msra.mxu0 0
    %596 = vmatprep.subr.bf16.mxu0 0
    %597 = vmatpush1.bf16.msra.mxu0 0
    %598 = vmatprep.subr.bf16.mxu0 0
    %599 = vmatpush1.bf16.msra.mxu0 0
    %600 = vmatprep.subr.bf16.mxu0 0
    %601 = vmatpush1.bf16.msra.mxu0 0
    %602 = vmatprep.subr.bf16.mxu0 0
    %603 = vmatpush1.bf16.msra.mxu0 0
    %604 = vmatprep.subr.bf16.mxu0 0
    %605 = vmatpush1.bf16.msra.mxu0 0
    %606 = vmatprep.subr.bf16.mxu0 0
    %607 = vmatpush1.bf16.msra.mxu0 0
    %608 = vmatprep.subr.bf16.mxu0 0
    %609 = vmatpush1.bf16.msra.mxu0 0
    %610 = vmatprep.subr.bf16.mxu0 0
    %611 = vmatpush1.bf16.msra.mxu0 0
    %612 = vmatprep.mubr.bf16.mxu0 0
    %613 = vmatmul.mubr.bf16.gmra.mrb[0].mxu0 %v496
    %v614 = vpop.f32.mrb[0].mxu0
    %v615 = vadd.f32 %v368, %v614
    %v616 = vpop.f32.mrb[0].mxu0
    %v617 = vadd.f32 %v370, %v616
    %v618 = vpop.f32.mrb[0].mxu0
    %v619 = vpop.f32.mrb[0].mxu0
    %620 = vdwg.mxu0
    %621 = vmatprep.subr.bf16.mxu0 %v470
    %622 = vmatpush1.bf16.msra.mxu0 %v469
    %623 = vmatprep.subr.bf16.mxu0 %v478
    %624 = vmatpush1.bf16.msra.mxu0 %v477
    %625 = vmatprep.subr.bf16.mxu0 0
    %626 = vmatpush1.bf16.msra.mxu0 0
    %627 = vmatprep.subr.bf16.mxu0 0
    %628 = vmatpush1.bf16.msra.mxu0 0
    %629 = vmatprep.subr.bf16.mxu0 0
    %630 = vmatpush1.bf16.msra.mxu0 0
    %631 = vmatprep.subr.bf16.mxu0 0
    %632 = vmatpush1.bf16.msra.mxu0 0
    %633 = vmatprep.subr.bf16.mxu0 0
    %634 = vmatpush1.bf16.msra.mxu0 0
    %635 = vmatprep.subr.bf16.mxu0 0
    %636 = vmatpush1.bf16.msra.mxu0 0
    %637 = vmatprep.subr.bf16.mxu0 0
    %638 = vmatpush1.bf16.msra.mxu0 0
    %639 = vmatprep.subr.bf16.mxu0 0
    %640 = vmatpush1.bf16.msra.mxu0 0
    %641 = vmatprep.subr.bf16.mxu0 0
    %642 = vmatpush1.bf16.msra.mxu0 0
    %643 = vmatprep.subr.bf16.mxu0 0
    %644 = vmatpush1.bf16.msra.mxu0 0
    %645 = vmatprep.subr.bf16.mxu0 0
    %646 = vmatpush1.bf16.msra.mxu0 0
    %647 = vmatprep.subr.bf16.mxu0 0
    %648 = vmatpush1.bf16.msra.mxu0 0
    %649 = vmatprep.subr.bf16.mxu0 0
    %650 = vmatpush1.bf16.msra.mxu0 0
    %651 = vmatprep.subr.bf16.mxu0 0
    %652 = vmatpush1.bf16.msra.mxu0 0
    %653 = vmatprep.mubr.bf16.mxu0 0
    %654 = vmatmul.mubr.bf16.gmra.mrb[0].mxu0 %v496
    %v655 = vpop.f32.mrb[0].mxu0
    %v656 = vadd.f32 %v409, %v655
    %v657 = vpop.f32.mrb[0].mxu0
    %v658 = vadd.f32 %v411, %v657
    %v659 = vpop.f32.mrb[0].mxu0
    %v660 = vpop.f32.mrb[0].mxu0
    %661 = vdwg.mxu0
    %v662 = vld [vmem:[%s4] sm:$0xff]
    %v664 = vlaneseq
    %v665 = vshrl.u32 %v664, 7
    %v666 = vsub.s32 0, %v665
    %v667 = vrot.slane %v662, %v666
    %v668 = vlaneseq
    %v669 = vshrl.u32 %v668, 7
    %v670 = vsub.s32 1, %v669
    %v671 = vrot.slane %v662, %v670
    %v672 = vlaneseq
    %v673 = vshrl.u32 %v672, 7
    %v674 = vsub.s32 2, %v673
    %v675 = vrot.slane %v662, %v674
    %v676 = vlaneseq
    %v677 = vshrl.u32 %v676, 7
    %v678 = vsub.s32 3, %v677
    %v679 = vrot.slane %v662, %v678
    %v680 = vlaneseq
    %v681 = vshrl.u32 %v680, 7
    %v682 = vsub.s32 4, %v681
    %v683 = vrot.slane %v662, %v682
    %v684 = vlaneseq
    %v685 = vshrl.u32 %v684, 7
    %v686 = vsub.s32 5, %v685
    %v687 = vrot.slane %v662, %v686
    %v688 = vlaneseq
    %v689 = vshrl.u32 %v688, 7
    %v690 = vsub.s32 6, %v689
    %v691 = vrot.slane %v662, %v690
    %v692 = vlaneseq
    %v693 = vshrl.u32 %v692, 7
    %v694 = vsub.s32 7, %v693
    %v695 = vrot.slane %v662, %v694
    %v704 = vadd.f32 %v533, %v667
    %v705 = vadd.f32 %v535, %v671
    %v706 = vadd.f32 %v574, %v675
    %v707 = vadd.f32 %v576, %v679
    %v708 = vadd.f32 %v615, %v683
    %v709 = vadd.f32 %v617, %v687
    %v710 = vadd.f32 %v656, %v691
    %v711 = vadd.f32 %v658, %v695
    %v712 = vmax.f32 %v704, 0.0
    %v713 = vmax.f32 %v705, 0.0
    %v714 = vmax.f32 %v706, 0.0
    %v715 = vmax.f32 %v707, 0.0
    %v716 = vmax.f32 %v708, 0.0
    %v717 = vmax.f32 %v709, 0.0
    %v718 = vmax.f32 %v710, 0.0
    %v719 = vmax.f32 %v711, 0.0
    %v720 = vpack.c.bf16 %v712, %v712
    %v721 = vpack.c.bf16 %v713, %v713
    %v722 = vpack.c.bf16 %v714, %v714
    %v723 = vpack.c.bf16 %v715, %v715
    %v724 = vpack.c.bf16 %v716, %v716
    %v725 = vpack.c.bf16 %v717, %v717
    %v726 = vpack.c.bf16 %v718, %v718
    %v727 = vpack.c.bf16 %v719, %v719
    %v728 = vld [vmem:[#allocation10] sm:$0xff]
    %v729 = vld [vmem:[#allocation10 + $0x8] sm:$0xff]
    %v730 = vld [vmem:[#allocation10 + $0x10] sm:$0xff]
    %v731 = vld [vmem:[#allocation10 + $0x18] sm:$0xff]
    %v732 = vld [vmem:[#allocation10 + $0x20] sm:$0xff]
    %v733 = vld [vmem:[#allocation10 + $0x28] sm:$0xff]
    %v734 = vld [vmem:[#allocation10 + $0x30] sm:$0xff]
    %v735 = vld [vmem:[#allocation10 + $0x38] sm:$0xff]
    %v736 = vld [vmem:[#allocation10 + $0x40] sm:$0xff]
    %v737 = vld [vmem:[#allocation10 + $0x48] sm:$0xff]
    %v738 = vld [vmem:[#allocation10 + $0x50] sm:$0xff]
    %v739 = vld [vmem:[#allocation10 + $0x58] sm:$0xff]
    %v740 = vld [vmem:[#allocation10 + $0x60] sm:$0xff]
    %v741 = vld [vmem:[#allocation10 + $0x68] sm:$0xff]
    %v742 = vld [vmem:[#allocation10 + $0x70] sm:$0xff]
    %v743 = vld [vmem:[#allocation10 + $0x78] sm:$0xff]
    %v744 = vld [vmem:[#allocation10 + $0x80] sm:$0xff]
    %v745 = vld [vmem:[#allocation10 + $0x88] sm:$0xff]
    %v746 = vld [vmem:[#allocation10 + $0x90] sm:$0xff]
    %v747 = vld [vmem:[#allocation10 + $0x98] sm:$0xff]
    %v748 = vld [vmem:[#allocation10 + $0xa0] sm:$0xff]
    %v749 = vld [vmem:[#allocation10 + $0xa8] sm:$0xff]
    %v750 = vld [vmem:[#allocation10 + $0xb0] sm:$0xff]
    %v751 = vld [vmem:[#allocation10 + $0xb8] sm:$0xff]
    %v752 = vld [vmem:[#allocation10 + $0xc0] sm:$0xff]
    %v753 = vld [vmem:[#allocation10 + $0xc8] sm:$0xff]
    %v754 = vld [vmem:[#allocation10 + $0xd0] sm:$0xff]
    %v755 = vld [vmem:[#allocation10 + $0xd8] sm:$0xff]
    %v756 = vld [vmem:[#allocation10 + $0xe0] sm:$0xff]
    %v757 = vld [vmem:[#allocation10 + $0xe8] sm:$0xff]
    %v758 = vld [vmem:[#allocation10 + $0xf0] sm:$0xff]
    %v759 = vld [vmem:[#allocation10 + $0xf8] sm:$0xff]
    %v760 = vld [vmem:[#allocation10 + $0x100] sm:$0xff]
    %v761 = vld [vmem:[#allocation10 + $0x108] sm:$0xff]
    %v762 = vld [vmem:[#allocation10 + $0x110] sm:$0xff]
    %v763 = vld [vmem:[#allocation10 + $0x118] sm:$0xff]
    %v764 = vld [vmem:[#allocation10 + $0x120] sm:$0xff]
    %v765 = vld [vmem:[#allocation10 + $0x128] sm:$0xff]
    %v766 = vld [vmem:[#allocation10 + $0x130] sm:$0xff]
    %v767 = vld [vmem:[#allocation10 + $0x138] sm:$0xff]
    %v768 = vld [vmem:[#allocation10 + $0x140] sm:$0xff]
    %v769 = vld [vmem:[#allocation10 + $0x148] sm:$0xff]
    %v770 = vld [vmem:[#allocation10 + $0x150] sm:$0xff]
    %v771 = vld [vmem:[#allocation10 + $0x158] sm:$0xff]
    %v772 = vld [vmem:[#allocation10 + $0x160] sm:$0xff]
    %v773 = vld [vmem:[#allocation10 + $0x168] sm:$0xff]
    %v774 = vld [vmem:[#allocation10 + $0x170] sm:$0xff]
    %v775 = vld [vmem:[#allocation10 + $0x178] sm:$0xff]
    %v776 = vld [vmem:[#allocation10 + $0x180] sm:$0xff]
    %v777 = vld [vmem:[#allocation10 + $0x188] sm:$0xff]
    %v778 = vld [vmem:[#allocation10 + $0x190] sm:$0xff]
    %v779 = vld [vmem:[#allocation10 + $0x198] sm:$0xff]
    %v780 = vld [vmem:[#allocation10 + $0x1a0] sm:$0xff]
    %v781 = vld [vmem:[#allocation10 + $0x1a8] sm:$0xff]
    %v782 = vld [vmem:[#allocation10 + $0x1b0] sm:$0xff]
    %v783 = vld [vmem:[#allocation10 + $0x1b8] sm:$0xff]
    %v784 = vld [vmem:[#allocation10 + $0x1c0] sm:$0xff]
    %v785 = vld [vmem:[#allocation10 + $0x1c8] sm:$0xff]
    %v786 = vld [vmem:[#allocation10 + $0x1d0] sm:$0xff]
    %v787 = vld [vmem:[#allocation10 + $0x1d8] sm:$0xff]
    %v788 = vld [vmem:[#allocation10 + $0x1e0] sm:$0xff]
    %v789 = vld [vmem:[#allocation10 + $0x1e8] sm:$0xff]
    %v790 = vld [vmem:[#allocation10 + $0x1f0] sm:$0xff]
    %v791 = vld [vmem:[#allocation10 + $0x1f8] sm:$0xff]
    %v792 = vld [vmem:[#allocation10 + $0x200] sm:$0xff]
    %v793 = vld [vmem:[#allocation10 + $0x208] sm:$0xff]
    %v794 = vld [vmem:[#allocation10 + $0x210] sm:$0xff]
    %v795 = vld [vmem:[#allocation10 + $0x218] sm:$0xff]
    %v796 = vld [vmem:[#allocation10 + $0x220] sm:$0xff]
    %v797 = vld [vmem:[#allocation10 + $0x228] sm:$0xff]
    %v798 = vld [vmem:[#allocation10 + $0x230] sm:$0xff]
    %v799 = vld [vmem:[#allocation10 + $0x238] sm:$0xff]
    %v800 = vld [vmem:[#allocation10 + $0x240] sm:$0xff]
    %v801 = vld [vmem:[#allocation10 + $0x248] sm:$0xff]
    %v802 = vld [vmem:[#allocation10 + $0x250] sm:$0xff]
    %v803 = vld [vmem:[#allocation10 + $0x258] sm:$0xff]
    %v804 = vld [vmem:[#allocation10 + $0x260] sm:$0xff]
    %v805 = vld [vmem:[#allocation10 + $0x268] sm:$0xff]
    %v806 = vld [vmem:[#allocation10 + $0x270] sm:$0xff]
    %v807 = vld [vmem:[#allocation10 + $0x278] sm:$0xff]
    %v808 = vld [vmem:[#allocation10 + $0x280] sm:$0xff]
    %v809 = vld [vmem:[#allocation10 + $0x288] sm:$0xff]
    %v810 = vld [vmem:[#allocation10 + $0x290] sm:$0xff]
    %v811 = vld [vmem:[#allocation10 + $0x298] sm:$0xff]
    %v812 = vld [vmem:[#allocation10 + $0x2a0] sm:$0xff]
    %v813 = vld [vmem:[#allocation10 + $0x2a8] sm:$0xff]
    %v814 = vld [vmem:[#allocation10 + $0x2b0] sm:$0xff]
    %v815 = vld [vmem:[#allocation10 + $0x2b8] sm:$0xff]
    %v816 = vld [vmem:[#allocation10 + $0x2c0] sm:$0xff]
    %v817 = vld [vmem:[#allocation10 + $0x2c8] sm:$0xff]
    %v818 = vld [vmem:[#allocation10 + $0x2d0] sm:$0xff]
    %v819 = vld [vmem:[#allocation10 + $0x2d8] sm:$0xff]
    %v820 = vld [vmem:[#allocation10 + $0x2e0] sm:$0xff]
    %v821 = vld [vmem:[#allocation10 + $0x2e8] sm:$0xff]
    %v822 = vld [vmem:[#allocation10 + $0x2f0] sm:$0xff]
    %v823 = vld [vmem:[#allocation10 + $0x2f8] sm:$0xff]
    %v824 = vld [vmem:[#allocation10 + $0x300] sm:$0xff]
    %v825 = vld [vmem:[#allocation10 + $0x308] sm:$0xff]
    %v826 = vld [vmem:[#allocation10 + $0x310] sm:$0xff]
    %v827 = vld [vmem:[#allocation10 + $0x318] sm:$0xff]
    %v828 = vld [vmem:[#allocation10 + $0x320] sm:$0xff]
    %v829 = vld [vmem:[#allocation10 + $0x328] sm:$0xff]
    %v830 = vld [vmem:[#allocation10 + $0x330] sm:$0xff]
    %v831 = vld [vmem:[#allocation10 + $0x338] sm:$0xff]
    %v832 = vld [vmem:[#allocation10 + $0x340] sm:$0xff]
    %v833 = vld [vmem:[#allocation10 + $0x348] sm:$0xff]
    %v834 = vld [vmem:[#allocation10 + $0x350] sm:$0xff]
    %v835 = vld [vmem:[#allocation10 + $0x358] sm:$0xff]
    %v836 = vld [vmem:[#allocation10 + $0x360] sm:$0xff]
    %v837 = vld [vmem:[#allocation10 + $0x368] sm:$0xff]
    %v838 = vld [vmem:[#allocation10 + $0x370] sm:$0xff]
    %v839 = vld [vmem:[#allocation10 + $0x378] sm:$0xff]
    %v840 = vld [vmem:[#allocation10 + $0x380] sm:$0xff]
    %v841 = vld [vmem:[#allocation10 + $0x388] sm:$0xff]
    %v842 = vld [vmem:[#allocation10 + $0x390] sm:$0xff]
    %v843 = vld [vmem:[#allocation10 + $0x398] sm:$0xff]
    %v844 = vld [vmem:[#allocation10 + $0x3a0] sm:$0xff]
    %v845 = vld [vmem:[#allocation10 + $0x3a8] sm:$0xff]
    %v846 = vld [vmem:[#allocation10 + $0x3b0] sm:$0xff]
    %v847 = vld [vmem:[#allocation10 + $0x3b8] sm:$0xff]
    %v848 = vld [vmem:[#allocation10 + $0x3c0] sm:$0xff]
    %v849 = vld [vmem:[#allocation10 + $0x3c8] sm:$0xff]
    %v850 = vld [vmem:[#allocation10 + $0x3d0] sm:$0xff]
    %v851 = vld [vmem:[#allocation10 + $0x3d8] sm:$0xff]
    %v852 = vld [vmem:[#allocation10 + $0x3e0] sm:$0xff]
    %v853 = vld [vmem:[#allocation10 + $0x3e8] sm:$0xff]
    %v854 = vld [vmem:[#allocation10 + $0x3f0] sm:$0xff]
    %v855 = vld [vmem:[#allocation10 + $0x3f8] sm:$0xff]
    %v856 = vld [vmem:[#allocation10 + $0x400] sm:$0xff]
    %v857 = vld [vmem:[#allocation10 + $0x408] sm:$0xff]
    %v858 = vld [vmem:[#allocation10 + $0x410] sm:$0xff]
    %v859 = vld [vmem:[#allocation10 + $0x418] sm:$0xff]
    %v860 = vld [vmem:[#allocation10 + $0x420] sm:$0xff]
    %v861 = vld [vmem:[#allocation10 + $0x428] sm:$0xff]
    %v862 = vld [vmem:[#allocation10 + $0x430] sm:$0xff]
    %v863 = vld [vmem:[#allocation10 + $0x438] sm:$0xff]
    %v864 = vld [vmem:[#allocation10 + $0x440] sm:$0xff]
    %v865 = vld [vmem:[#allocation10 + $0x448] sm:$0xff]
    %v866 = vld [vmem:[#allocation10 + $0x450] sm:$0xff]
    %v867 = vld [vmem:[#allocation10 + $0x458] sm:$0xff]
    %v868 = vld [vmem:[#allocation10 + $0x460] sm:$0xff]
    %v869 = vld [vmem:[#allocation10 + $0x468] sm:$0xff]
    %v870 = vld [vmem:[#allocation10 + $0x470] sm:$0xff]
    %v871 = vld [vmem:[#allocation10 + $0x478] sm:$0xff]
    %v872 = vld [vmem:[#allocation10 + $0x480] sm:$0xff]
    %v873 = vld [vmem:[#allocation10 + $0x488] sm:$0xff]
    %v874 = vld [vmem:[#allocation10 + $0x490] sm:$0xff]
    %v875 = vld [vmem:[#allocation10 + $0x498] sm:$0xff]
    %v876 = vld [vmem:[#allocation10 + $0x4a0] sm:$0xff]
    %v877 = vld [vmem:[#allocation10 + $0x4a8] sm:$0xff]
    %v878 = vld [vmem:[#allocation10 + $0x4b0] sm:$0xff]
    %v879 = vld [vmem:[#allocation10 + $0x4b8] sm:$0xff]
    %v880 = vld [vmem:[#allocation10 + $0x4c0] sm:$0xff]
    %v881 = vld [vmem:[#allocation10 + $0x4c8] sm:$0xff]
    %v882 = vld [vmem:[#allocation10 + $0x4d0] sm:$0xff]
    %v883 = vld [vmem:[#allocation10 + $0x4d8] sm:$0xff]
    %v884 = vld [vmem:[#allocation10 + $0x4e0] sm:$0xff]
    %v885 = vld [vmem:[#allocation10 + $0x4e8] sm:$0xff]
    %v886 = vld [vmem:[#allocation10 + $0x4f0] sm:$0xff]
    %v887 = vld [vmem:[#allocation10 + $0x4f8] sm:$0xff]
    %v888 = vld [vmem:[#allocation10 + $0x500] sm:$0xff]
    %v889 = vld [vmem:[#allocation10 + $0x508] sm:$0xff]
    %v890 = vld [vmem:[#allocation10 + $0x510] sm:$0xff]
    %v891 = vld [vmem:[#allocation10 + $0x518] sm:$0xff]
    %v892 = vld [vmem:[#allocation10 + $0x520] sm:$0xff]
    %v893 = vld [vmem:[#allocation10 + $0x528] sm:$0xff]
    %v894 = vld [vmem:[#allocation10 + $0x530] sm:$0xff]
    %v895 = vld [vmem:[#allocation10 + $0x538] sm:$0xff]
    %v896 = vld [vmem:[#allocation10 + $0x540] sm:$0xff]
    %v897 = vld [vmem:[#allocation10 + $0x548] sm:$0xff]
    %v898 = vld [vmem:[#allocation10 + $0x550] sm:$0xff]
    %v899 = vld [vmem:[#allocation10 + $0x558] sm:$0xff]
    %v900 = vld [vmem:[#allocation10 + $0x560] sm:$0xff]
    %v901 = vld [vmem:[#allocation10 + $0x568] sm:$0xff]
    %v902 = vld [vmem:[#allocation10 + $0x570] sm:$0xff]
    %v903 = vld [vmem:[#allocation10 + $0x578] sm:$0xff]
    %v904 = vld [vmem:[#allocation10 + $0x580] sm:$0xff]
    %v905 = vld [vmem:[#allocation10 + $0x588] sm:$0xff]
    %v906 = vld [vmem:[#allocation10 + $0x590] sm:$0xff]
    %v907 = vld [vmem:[#allocation10 + $0x598] sm:$0xff]
    %v908 = vld [vmem:[#allocation10 + $0x5a0] sm:$0xff]
    %v909 = vld [vmem:[#allocation10 + $0x5a8] sm:$0xff]
    %v910 = vld [vmem:[#allocation10 + $0x5b0] sm:$0xff]
    %v911 = vld [vmem:[#allocation10 + $0x5b8] sm:$0xff]
    %v912 = vld [vmem:[#allocation10 + $0x5c0] sm:$0xff]
    %v913 = vld [vmem:[#allocation10 + $0x5c8] sm:$0xff]
    %v914 = vld [vmem:[#allocation10 + $0x5d0] sm:$0xff]
    %v915 = vld [vmem:[#allocation10 + $0x5d8] sm:$0xff]
    %v916 = vld [vmem:[#allocation10 + $0x5e0] sm:$0xff]
    %v917 = vld [vmem:[#allocation10 + $0x5e8] sm:$0xff]
    %v918 = vld [vmem:[#allocation10 + $0x5f0] sm:$0xff]
    %v919 = vld [vmem:[#allocation10 + $0x5f8] sm:$0xff]
    %v920 = vld [vmem:[#allocation10 + $0x600] sm:$0xff]
    %v921 = vld [vmem:[#allocation10 + $0x608] sm:$0xff]
    %v922 = vld [vmem:[#allocation10 + $0x610] sm:$0xff]
    %v923 = vld [vmem:[#allocation10 + $0x618] sm:$0xff]
    %v924 = vld [vmem:[#allocation10 + $0x620] sm:$0xff]
    %v925 = vld [vmem:[#allocation10 + $0x628] sm:$0xff]
    %v926 = vld [vmem:[#allocation10 + $0x630] sm:$0xff]
    %v927 = vld [vmem:[#allocation10 + $0x638] sm:$0xff]
    %v928 = vld [vmem:[#allocation10 + $0x640] sm:$0xff]
    %v929 = vld [vmem:[#allocation10 + $0x648] sm:$0xff]
    %v930 = vld [vmem:[#allocation10 + $0x650] sm:$0xff]
    %v931 = vld [vmem:[#allocation10 + $0x658] sm:$0xff]
    %v932 = vld [vmem:[#allocation10 + $0x660] sm:$0xff]
    %v933 = vld [vmem:[#allocation10 + $0x668] sm:$0xff]
    %v934 = vld [vmem:[#allocation10 + $0x670] sm:$0xff]
    %v935 = vld [vmem:[#allocation10 + $0x678] sm:$0xff]
    %v936 = vld [vmem:[#allocation10 + $0x680] sm:$0xff]
    %v937 = vld [vmem:[#allocation10 + $0x688] sm:$0xff]
    %v938 = vld [vmem:[#allocation10 + $0x690] sm:$0xff]
    %v939 = vld [vmem:[#allocation10 + $0x698] sm:$0xff]
    %v940 = vld [vmem:[#allocation10 + $0x6a0] sm:$0xff]
    %v941 = vld [vmem:[#allocation10 + $0x6a8] sm:$0xff]
    %v942 = vld [vmem:[#allocation10 + $0x6b0] sm:$0xff]
    %v943 = vld [vmem:[#allocation10 + $0x6b8] sm:$0xff]
    %v944 = vld [vmem:[#allocation10 + $0x6c0] sm:$0xff]
    %v945 = vld [vmem:[#allocation10 + $0x6c8] sm:$0xff]
    %v946 = vld [vmem:[#allocation10 + $0x6d0] sm:$0xff]
    %v947 = vld [vmem:[#allocation10 + $0x6d8] sm:$0xff]
    %v948 = vld [vmem:[#allocation10 + $0x6e0] sm:$0xff]
    %v949 = vld [vmem:[#allocation10 + $0x6e8] sm:$0xff]
    %v950 = vld [vmem:[#allocation10 + $0x6f0] sm:$0xff]
    %v951 = vld [vmem:[#allocation10 + $0x6f8] sm:$0xff]
    %v952 = vld [vmem:[#allocation10 + $0x700] sm:$0xff]
    %v953 = vld [vmem:[#allocation10 + $0x708] sm:$0xff]
    %v954 = vld [vmem:[#allocation10 + $0x710] sm:$0xff]
    %v955 = vld [vmem:[#allocation10 + $0x718] sm:$0xff]
    %v956 = vld [vmem:[#allocation10 + $0x720] sm:$0xff]
    %v957 = vld [vmem:[#allocation10 + $0x728] sm:$0xff]
    %v958 = vld [vmem:[#allocation10 + $0x730] sm:$0xff]
    %v959 = vld [vmem:[#allocation10 + $0x738] sm:$0xff]
    %v960 = vld [vmem:[#allocation10 + $0x740] sm:$0xff]
    %v961 = vld [vmem:[#allocation10 + $0x748] sm:$0xff]
    %v962 = vld [vmem:[#allocation10 + $0x750] sm:$0xff]
    %v963 = vld [vmem:[#allocation10 + $0x758] sm:$0xff]
    %v964 = vld [vmem:[#allocation10 + $0x760] sm:$0xff]
    %v965 = vld [vmem:[#allocation10 + $0x768] sm:$0xff]
    %v966 = vld [vmem:[#allocation10 + $0x770] sm:$0xff]
    %v967 = vld [vmem:[#allocation10 + $0x778] sm:$0xff]
    %v968 = vld [vmem:[#allocation10 + $0x780] sm:$0xff]
    %v969 = vld [vmem:[#allocation10 + $0x788] sm:$0xff]
    %v970 = vld [vmem:[#allocation10 + $0x790] sm:$0xff]
    %v971 = vld [vmem:[#allocation10 + $0x798] sm:$0xff]
    %v972 = vld [vmem:[#allocation10 + $0x7a0] sm:$0xff]
    %v973 = vld [vmem:[#allocation10 + $0x7a8] sm:$0xff]
    %v974 = vld [vmem:[#allocation10 + $0x7b0] sm:$0xff]
    %v975 = vld [vmem:[#allocation10 + $0x7b8] sm:$0xff]
    %v976 = vld [vmem:[#allocation10 + $0x7c0] sm:$0xff]
    %v977 = vld [vmem:[#allocation10 + $0x7c8] sm:$0xff]
    %v978 = vld [vmem:[#allocation10 + $0x7d0] sm:$0xff]
    %v979 = vld [vmem:[#allocation10 + $0x7d8] sm:$0xff]
    %v980 = vld [vmem:[#allocation10 + $0x7e0] sm:$0xff]
    %v981 = vld [vmem:[#allocation10 + $0x7e8] sm:$0xff]
    %v982 = vld [vmem:[#allocation10 + $0x7f0] sm:$0xff]
    %v983 = vld [vmem:[#allocation10 + $0x7f8] sm:$0xff]
    %v984 = vld [vmem:[%s6] sm:$0xf]
    %v986 = vlaneseq
    %v987 = vshrl.u32 %v986, 7
    %v988 = vsub.s32 0, %v987
    %v989 = vrot.slane %v984, %v988
    %v990 = vlaneseq
    %v991 = vshrl.u32 %v990, 7
    %v992 = vsub.s32 1, %v991
    %v993 = vrot.slane %v984, %v992
    %v994 = vlaneseq
    %v995 = vshrl.u32 %v994, 7
    %v996 = vsub.s32 2, %v995
    %v997 = vrot.slane %v984, %v996
    %v998 = vlaneseq
    %v999 = vshrl.u32 %v998, 7
    %v1000 = vsub.s32 3, %v999
    %v1001 = vrot.slane %v984, %v1000
    %v1262 = vunpack.c.l.b16 %v728
    %v1263 = vunpack.c.h.b16 %v728
    %v1264 = vunpack.c.l.b16 %v729
    %v1265 = vunpack.c.h.b16 %v729
    %v1266 = vunpack.c.l.b16 %v730
    %v1267 = vunpack.c.h.b16 %v730
    %v1268 = vunpack.c.l.b16 %v731
    %v1269 = vunpack.c.h.b16 %v731
    %v1270 = vunpack.c.l.b16 %v732
    %v1271 = vunpack.c.h.b16 %v732
    %v1272 = vunpack.c.l.b16 %v733
    %v1273 = vunpack.c.h.b16 %v733
    %v1274 = vunpack.c.l.b16 %v734
    %v1275 = vunpack.c.h.b16 %v734
    %v1276 = vunpack.c.l.b16 %v735
    %v1277 = vunpack.c.h.b16 %v735
    %v1278 = vunpack.c.l.b16 %v736
    %v1279 = vunpack.c.h.b16 %v736
    %v1280 = vunpack.c.l.b16 %v737
    %v1281 = vunpack.c.h.b16 %v737
    %v1282 = vunpack.c.l.b16 %v738
    %v1283 = vunpack.c.h.b16 %v738
    %v1284 = vunpack.c.l.b16 %v739
    %v1285 = vunpack.c.h.b16 %v739
    %v1286 = vunpack.c.l.b16 %v740
    %v1287 = vunpack.c.h.b16 %v740
    %v1288 = vunpack.c.l.b16 %v741
    %v1289 = vunpack.c.h.b16 %v741
    %v1290 = vunpack.c.l.b16 %v742
    %v1291 = vunpack.c.h.b16 %v742
    %v1292 = vunpack.c.l.b16 %v743
    %v1293 = vunpack.c.h.b16 %v743
    %v1294 = vunpack.c.l.b16 %v744
    %v1295 = vunpack.c.h.b16 %v744
    %v1296 = vunpack.c.l.b16 %v745
    %v1297 = vunpack.c.h.b16 %v745
    %v1298 = vunpack.c.l.b16 %v746
    %v1299 = vunpack.c.h.b16 %v746
    %v1300 = vunpack.c.l.b16 %v747
    %v1301 = vunpack.c.h.b16 %v747
    %v1302 = vunpack.c.l.b16 %v748
    %v1303 = vunpack.c.h.b16 %v748
    %v1304 = vunpack.c.l.b16 %v749
    %v1305 = vunpack.c.h.b16 %v749
    %v1306 = vunpack.c.l.b16 %v750
    %v1307 = vunpack.c.h.b16 %v750
    %v1308 = vunpack.c.l.b16 %v751
    %v1309 = vunpack.c.h.b16 %v751
    %v1310 = vunpack.c.l.b16 %v752
    %v1311 = vunpack.c.h.b16 %v752
    %v1312 = vunpack.c.l.b16 %v753
    %v1313 = vunpack.c.h.b16 %v753
    %v1314 = vunpack.c.l.b16 %v754
    %v1315 = vunpack.c.h.b16 %v754
    %v1316 = vunpack.c.l.b16 %v755
    %v1317 = vunpack.c.h.b16 %v755
    %v1318 = vunpack.c.l.b16 %v756
    %v1319 = vunpack.c.h.b16 %v756
    %v1320 = vunpack.c.l.b16 %v757
    %v1321 = vunpack.c.h.b16 %v757
    %v1322 = vunpack.c.l.b16 %v758
    %v1323 = vunpack.c.h.b16 %v758
    %v1324 = vunpack.c.l.b16 %v759
    %v1325 = vunpack.c.h.b16 %v759
    %v1326 = vunpack.c.l.b16 %v760
    %v1327 = vunpack.c.h.b16 %v760
    %v1328 = vunpack.c.l.b16 %v761
    %v1329 = vunpack.c.h.b16 %v761
    %v1330 = vunpack.c.l.b16 %v762
    %v1331 = vunpack.c.h.b16 %v762
    %v1332 = vunpack.c.l.b16 %v763
    %v1333 = vunpack.c.h.b16 %v763
    %v1334 = vunpack.c.l.b16 %v764
    %v1335 = vunpack.c.h.b16 %v764
    %v1336 = vunpack.c.l.b16 %v765
    %v1337 = vunpack.c.h.b16 %v765
    %v1338 = vunpack.c.l.b16 %v766
    %v1339 = vunpack.c.h.b16 %v766
    %v1340 = vunpack.c.l.b16 %v767
    %v1341 = vunpack.c.h.b16 %v767
    %v1342 = vunpack.c.l.b16 %v768
    %v1343 = vunpack.c.h.b16 %v768
    %v1344 = vunpack.c.l.b16 %v769
    %v1345 = vunpack.c.h.b16 %v769
    %v1346 = vunpack.c.l.b16 %v770
    %v1347 = vunpack.c.h.b16 %v770
    %v1348 = vunpack.c.l.b16 %v771
    %v1349 = vunpack.c.h.b16 %v771
    %v1350 = vunpack.c.l.b16 %v772
    %v1351 = vunpack.c.h.b16 %v772
    %v1352 = vunpack.c.l.b16 %v773
    %v1353 = vunpack.c.h.b16 %v773
    %v1354 = vunpack.c.l.b16 %v774
    %v1355 = vunpack.c.h.b16 %v774
    %v1356 = vunpack.c.l.b16 %v775
    %v1357 = vunpack.c.h.b16 %v775
    %v1358 = vunpack.c.l.b16 %v776
    %v1359 = vunpack.c.h.b16 %v776
    %v1360 = vunpack.c.l.b16 %v777
    %v1361 = vunpack.c.h.b16 %v777
    %v1362 = vunpack.c.l.b16 %v778
    %v1363 = vunpack.c.h.b16 %v778
    %v1364 = vunpack.c.l.b16 %v779
    %v1365 = vunpack.c.h.b16 %v779
    %v1366 = vunpack.c.l.b16 %v780
    %v1367 = vunpack.c.h.b16 %v780
    %v1368 = vunpack.c.l.b16 %v781
    %v1369 = vunpack.c.h.b16 %v781
    %v1370 = vunpack.c.l.b16 %v782
    %v1371 = vunpack.c.h.b16 %v782
    %v1372 = vunpack.c.l.b16 %v783
    %v1373 = vunpack.c.h.b16 %v783
    %v1374 = vunpack.c.l.b16 %v784
    %v1375 = vunpack.c.h.b16 %v784
    %v1376 = vunpack.c.l.b16 %v785
    %v1377 = vunpack.c.h.b16 %v785
    %v1378 = vunpack.c.l.b16 %v786
    %v1379 = vunpack.c.h.b16 %v786
    %v1380 = vunpack.c.l.b16 %v787
    %v1381 = vunpack.c.h.b16 %v787
    %v1382 = vunpack.c.l.b16 %v788
    %v1383 = vunpack.c.h.b16 %v788
    %v1384 = vunpack.c.l.b16 %v789
    %v1385 = vunpack.c.h.b16 %v789
    %v1386 = vunpack.c.l.b16 %v790
    %v1387 = vunpack.c.h.b16 %v790
    %v1388 = vunpack.c.l.b16 %v791
    %v1389 = vunpack.c.h.b16 %v791
    %v1390 = vunpack.c.l.b16 %v792
    %v1391 = vunpack.c.h.b16 %v792
    %v1392 = vunpack.c.l.b16 %v793
    %v1393 = vunpack.c.h.b16 %v793
    %v1394 = vunpack.c.l.b16 %v794
    %v1395 = vunpack.c.h.b16 %v794
    %v1396 = vunpack.c.l.b16 %v795
    %v1397 = vunpack.c.h.b16 %v795
    %v1398 = vunpack.c.l.b16 %v796
    %v1399 = vunpack.c.h.b16 %v796
    %v1400 = vunpack.c.l.b16 %v797
    %v1401 = vunpack.c.h.b16 %v797
    %v1402 = vunpack.c.l.b16 %v798
    %v1403 = vunpack.c.h.b16 %v798
    %v1404 = vunpack.c.l.b16 %v799
    %v1405 = vunpack.c.h.b16 %v799
    %v1406 = vunpack.c.l.b16 %v800
    %v1407 = vunpack.c.h.b16 %v800
    %v1408 = vunpack.c.l.b16 %v801
    %v1409 = vunpack.c.h.b16 %v801
    %v1410 = vunpack.c.l.b16 %v802
    %v1411 = vunpack.c.h.b16 %v802
    %v1412 = vunpack.c.l.b16 %v803
    %v1413 = vunpack.c.h.b16 %v803
    %v1414 = vunpack.c.l.b16 %v804
    %v1415 = vunpack.c.h.b16 %v804
    %v1416 = vunpack.c.l.b16 %v805
    %v1417 = vunpack.c.h.b16 %v805
    %v1418 = vunpack.c.l.b16 %v806
    %v1419 = vunpack.c.h.b16 %v806
    %v1420 = vunpack.c.l.b16 %v807
    %v1421 = vunpack.c.h.b16 %v807
    %v1422 = vunpack.c.l.b16 %v808
    %v1423 = vunpack.c.h.b16 %v808
    %v1424 = vunpack.c.l.b16 %v809
    %v1425 = vunpack.c.h.b16 %v809
    %v1426 = vunpack.c.l.b16 %v810
    %v1427 = vunpack.c.h.b16 %v810
    %v1428 = vunpack.c.l.b16 %v811
    %v1429 = vunpack.c.h.b16 %v811
    %v1430 = vunpack.c.l.b16 %v812
    %v1431 = vunpack.c.h.b16 %v812
    %v1432 = vunpack.c.l.b16 %v813
    %v1433 = vunpack.c.h.b16 %v813
    %v1434 = vunpack.c.l.b16 %v814
    %v1435 = vunpack.c.h.b16 %v814
    %v1436 = vunpack.c.l.b16 %v815
    %v1437 = vunpack.c.h.b16 %v815
    %v1438 = vunpack.c.l.b16 %v816
    %v1439 = vunpack.c.h.b16 %v816
    %v1440 = vunpack.c.l.b16 %v817
    %v1441 = vunpack.c.h.b16 %v817
    %v1442 = vunpack.c.l.b16 %v818
    %v1443 = vunpack.c.h.b16 %v818
    %v1444 = vunpack.c.l.b16 %v819
    %v1445 = vunpack.c.h.b16 %v819
    %v1446 = vunpack.c.l.b16 %v820
    %v1447 = vunpack.c.h.b16 %v820
    %v1448 = vunpack.c.l.b16 %v821
    %v1449 = vunpack.c.h.b16 %v821
    %v1450 = vunpack.c.l.b16 %v822
    %v1451 = vunpack.c.h.b16 %v822
    %v1452 = vunpack.c.l.b16 %v823
    %v1453 = vunpack.c.h.b16 %v823
    %v1454 = vunpack.c.l.b16 %v824
    %v1455 = vunpack.c.h.b16 %v824
    %v1456 = vunpack.c.l.b16 %v825
    %v1457 = vunpack.c.h.b16 %v825
    %v1458 = vunpack.c.l.b16 %v826
    %v1459 = vunpack.c.h.b16 %v826
    %v1460 = vunpack.c.l.b16 %v827
    %v1461 = vunpack.c.h.b16 %v827
    %v1462 = vunpack.c.l.b16 %v828
    %v1463 = vunpack.c.h.b16 %v828
    %v1464 = vunpack.c.l.b16 %v829
    %v1465 = vunpack.c.h.b16 %v829
    %v1466 = vunpack.c.l.b16 %v830
    %v1467 = vunpack.c.h.b16 %v830
    %v1468 = vunpack.c.l.b16 %v831
    %v1469 = vunpack.c.h.b16 %v831
    %v1470 = vunpack.c.l.b16 %v832
    %v1471 = vunpack.c.h.b16 %v832
    %v1472 = vunpack.c.l.b16 %v833
    %v1473 = vunpack.c.h.b16 %v833
    %v1474 = vunpack.c.l.b16 %v834
    %v1475 = vunpack.c.h.b16 %v834
    %v1476 = vunpack.c.l.b16 %v835
    %v1477 = vunpack.c.h.b16 %v835
    %v1478 = vunpack.c.l.b16 %v836
    %v1479 = vunpack.c.h.b16 %v836
    %v1480 = vunpack.c.l.b16 %v837
    %v1481 = vunpack.c.h.b16 %v837
    %v1482 = vunpack.c.l.b16 %v838
    %v1483 = vunpack.c.h.b16 %v838
    %v1484 = vunpack.c.l.b16 %v839
    %v1485 = vunpack.c.h.b16 %v839
    %v1486 = vunpack.c.l.b16 %v840
    %v1487 = vunpack.c.h.b16 %v840
    %v1488 = vunpack.c.l.b16 %v841
    %v1489 = vunpack.c.h.b16 %v841
    %v1490 = vunpack.c.l.b16 %v842
    %v1491 = vunpack.c.h.b16 %v842
    %v1492 = vunpack.c.l.b16 %v843
    %v1493 = vunpack.c.h.b16 %v843
    %v1494 = vunpack.c.l.b16 %v844
    %v1495 = vunpack.c.h.b16 %v844
    %v1496 = vunpack.c.l.b16 %v845
    %v1497 = vunpack.c.h.b16 %v845
    %v1498 = vunpack.c.l.b16 %v846
    %v1499 = vunpack.c.h.b16 %v846
    %v1500 = vunpack.c.l.b16 %v847
    %v1501 = vunpack.c.h.b16 %v847
    %v1502 = vunpack.c.l.b16 %v848
    %v1503 = vunpack.c.h.b16 %v848
    %v1504 = vunpack.c.l.b16 %v849
    %v1505 = vunpack.c.h.b16 %v849
    %v1506 = vunpack.c.l.b16 %v850
    %v1507 = vunpack.c.h.b16 %v850
    %v1508 = vunpack.c.l.b16 %v851
    %v1509 = vunpack.c.h.b16 %v851
    %v1510 = vunpack.c.l.b16 %v852
    %v1511 = vunpack.c.h.b16 %v852
    %v1512 = vunpack.c.l.b16 %v853
    %v1513 = vunpack.c.h.b16 %v853
    %v1514 = vunpack.c.l.b16 %v854
    %v1515 = vunpack.c.h.b16 %v854
    %v1516 = vunpack.c.l.b16 %v855
    %v1517 = vunpack.c.h.b16 %v855
    %v1518 = vunpack.c.l.b16 %v856
    %v1519 = vunpack.c.h.b16 %v856
    %v1520 = vunpack.c.l.b16 %v857
    %v1521 = vunpack.c.h.b16 %v857
    %v1522 = vunpack.c.l.b16 %v858
    %v1523 = vunpack.c.h.b16 %v858
    %v1524 = vunpack.c.l.b16 %v859
    %v1525 = vunpack.c.h.b16 %v859
    %v1526 = vunpack.c.l.b16 %v860
    %v1527 = vunpack.c.h.b16 %v860
    %v1528 = vunpack.c.l.b16 %v861
    %v1529 = vunpack.c.h.b16 %v861
    %v1530 = vunpack.c.l.b16 %v862
    %v1531 = vunpack.c.h.b16 %v862
    %v1532 = vunpack.c.l.b16 %v863
    %v1533 = vunpack.c.h.b16 %v863
    %v1534 = vunpack.c.l.b16 %v864
    %v1535 = vunpack.c.h.b16 %v864
    %v1536 = vunpack.c.l.b16 %v865
    %v1537 = vunpack.c.h.b16 %v865
    %v1538 = vunpack.c.l.b16 %v866
    %v1539 = vunpack.c.h.b16 %v866
    %v1540 = vunpack.c.l.b16 %v867
    %v1541 = vunpack.c.h.b16 %v867
    %v1542 = vunpack.c.l.b16 %v868
    %v1543 = vunpack.c.h.b16 %v868
    %v1544 = vunpack.c.l.b16 %v869
    %v1545 = vunpack.c.h.b16 %v869
    %v1546 = vunpack.c.l.b16 %v870
    %v1547 = vunpack.c.h.b16 %v870
    %v1548 = vunpack.c.l.b16 %v871
    %v1549 = vunpack.c.h.b16 %v871
    %v1550 = vunpack.c.l.b16 %v872
    %v1551 = vunpack.c.h.b16 %v872
    %v1552 = vunpack.c.l.b16 %v873
    %v1553 = vunpack.c.h.b16 %v873
    %v1554 = vunpack.c.l.b16 %v874
    %v1555 = vunpack.c.h.b16 %v874
    %v1556 = vunpack.c.l.b16 %v875
    %v1557 = vunpack.c.h.b16 %v875
    %v1558 = vunpack.c.l.b16 %v876
    %v1559 = vunpack.c.h.b16 %v876
    %v1560 = vunpack.c.l.b16 %v877
    %v1561 = vunpack.c.h.b16 %v877
    %v1562 = vunpack.c.l.b16 %v878
    %v1563 = vunpack.c.h.b16 %v878
    %v1564 = vunpack.c.l.b16 %v879
    %v1565 = vunpack.c.h.b16 %v879
    %v1566 = vunpack.c.l.b16 %v880
    %v1567 = vunpack.c.h.b16 %v880
    %v1568 = vunpack.c.l.b16 %v881
    %v1569 = vunpack.c.h.b16 %v881
    %v1570 = vunpack.c.l.b16 %v882
    %v1571 = vunpack.c.h.b16 %v882
    %v1572 = vunpack.c.l.b16 %v883
    %v1573 = vunpack.c.h.b16 %v883
    %v1574 = vunpack.c.l.b16 %v884
    %v1575 = vunpack.c.h.b16 %v884
    %v1576 = vunpack.c.l.b16 %v885
    %v1577 = vunpack.c.h.b16 %v885
    %v1578 = vunpack.c.l.b16 %v886
    %v1579 = vunpack.c.h.b16 %v886
    %v1580 = vunpack.c.l.b16 %v887
    %v1581 = vunpack.c.h.b16 %v887
    %v1582 = vunpack.c.l.b16 %v888
    %v1583 = vunpack.c.h.b16 %v888
    %v1584 = vunpack.c.l.b16 %v889
    %v1585 = vunpack.c.h.b16 %v889
    %v1586 = vunpack.c.l.b16 %v890
    %v1587 = vunpack.c.h.b16 %v890
    %v1588 = vunpack.c.l.b16 %v891
    %v1589 = vunpack.c.h.b16 %v891
    %v1590 = vunpack.c.l.b16 %v892
    %v1591 = vunpack.c.h.b16 %v892
    %v1592 = vunpack.c.l.b16 %v893
    %v1593 = vunpack.c.h.b16 %v893
    %v1594 = vunpack.c.l.b16 %v894
    %v1595 = vunpack.c.h.b16 %v894
    %v1596 = vunpack.c.l.b16 %v895
    %v1597 = vunpack.c.h.b16 %v895
    %v1598 = vunpack.c.l.b16 %v896
    %v1599 = vunpack.c.h.b16 %v896
    %v1600 = vunpack.c.l.b16 %v897
    %v1601 = vunpack.c.h.b16 %v897
    %v1602 = vunpack.c.l.b16 %v898
    %v1603 = vunpack.c.h.b16 %v898
    %v1604 = vunpack.c.l.b16 %v899
    %v1605 = vunpack.c.h.b16 %v899
    %v1606 = vunpack.c.l.b16 %v900
    %v1607 = vunpack.c.h.b16 %v900
    %v1608 = vunpack.c.l.b16 %v901
    %v1609 = vunpack.c.h.b16 %v901
    %v1610 = vunpack.c.l.b16 %v902
    %v1611 = vunpack.c.h.b16 %v902
    %v1612 = vunpack.c.l.b16 %v903
    %v1613 = vunpack.c.h.b16 %v903
    %v1614 = vunpack.c.l.b16 %v904
    %v1615 = vunpack.c.h.b16 %v904
    %v1616 = vunpack.c.l.b16 %v905
    %v1617 = vunpack.c.h.b16 %v905
    %v1618 = vunpack.c.l.b16 %v906
    %v1619 = vunpack.c.h.b16 %v906
    %v1620 = vunpack.c.l.b16 %v907
    %v1621 = vunpack.c.h.b16 %v907
    %v1622 = vunpack.c.l.b16 %v908
    %v1623 = vunpack.c.h.b16 %v908
    %v1624 = vunpack.c.l.b16 %v909
    %v1625 = vunpack.c.h.b16 %v909
    %v1626 = vunpack.c.l.b16 %v910
    %v1627 = vunpack.c.h.b16 %v910
    %v1628 = vunpack.c.l.b16 %v911
    %v1629 = vunpack.c.h.b16 %v911
    %v1630 = vunpack.c.l.b16 %v912
    %v1631 = vunpack.c.h.b16 %v912
    %v1632 = vunpack.c.l.b16 %v913
    %v1633 = vunpack.c.h.b16 %v913
    %v1634 = vunpack.c.l.b16 %v914
    %v1635 = vunpack.c.h.b16 %v914
    %v1636 = vunpack.c.l.b16 %v915
    %v1637 = vunpack.c.h.b16 %v915
    %v1638 = vunpack.c.l.b16 %v916
    %v1639 = vunpack.c.h.b16 %v916
    %v1640 = vunpack.c.l.b16 %v917
    %v1641 = vunpack.c.h.b16 %v917
    %v1642 = vunpack.c.l.b16 %v918
    %v1643 = vunpack.c.h.b16 %v918
    %v1644 = vunpack.c.l.b16 %v919
    %v1645 = vunpack.c.h.b16 %v919
    %v1646 = vunpack.c.l.b16 %v920
    %v1647 = vunpack.c.h.b16 %v920
    %v1648 = vunpack.c.l.b16 %v921
    %v1649 = vunpack.c.h.b16 %v921
    %v1650 = vunpack.c.l.b16 %v922
    %v1651 = vunpack.c.h.b16 %v922
    %v1652 = vunpack.c.l.b16 %v923
    %v1653 = vunpack.c.h.b16 %v923
    %v1654 = vunpack.c.l.b16 %v924
    %v1655 = vunpack.c.h.b16 %v924
    %v1656 = vunpack.c.l.b16 %v925
    %v1657 = vunpack.c.h.b16 %v925
    %v1658 = vunpack.c.l.b16 %v926
    %v1659 = vunpack.c.h.b16 %v926
    %v1660 = vunpack.c.l.b16 %v927
    %v1661 = vunpack.c.h.b16 %v927
    %v1662 = vunpack.c.l.b16 %v928
    %v1663 = vunpack.c.h.b16 %v928
    %v1664 = vunpack.c.l.b16 %v929
    %v1665 = vunpack.c.h.b16 %v929
    %v1666 = vunpack.c.l.b16 %v930
    %v1667 = vunpack.c.h.b16 %v930
    %v1668 = vunpack.c.l.b16 %v931
    %v1669 = vunpack.c.h.b16 %v931
    %v1670 = vunpack.c.l.b16 %v932
    %v1671 = vunpack.c.h.b16 %v932
    %v1672 = vunpack.c.l.b16 %v933
    %v1673 = vunpack.c.h.b16 %v933
    %v1674 = vunpack.c.l.b16 %v934
    %v1675 = vunpack.c.h.b16 %v934
    %v1676 = vunpack.c.l.b16 %v935
    %v1677 = vunpack.c.h.b16 %v935
    %v1678 = vunpack.c.l.b16 %v936
    %v1679 = vunpack.c.h.b16 %v936
    %v1680 = vunpack.c.l.b16 %v937
    %v1681 = vunpack.c.h.b16 %v937
    %v1682 = vunpack.c.l.b16 %v938
    %v1683 = vunpack.c.h.b16 %v938
    %v1684 = vunpack.c.l.b16 %v939
    %v1685 = vunpack.c.h.b16 %v939
    %v1686 = vunpack.c.l.b16 %v940
    %v1687 = vunpack.c.h.b16 %v940
    %v1688 = vunpack.c.l.b16 %v941
    %v1689 = vunpack.c.h.b16 %v941
    %v1690 = vunpack.c.l.b16 %v942
    %v1691 = vunpack.c.h.b16 %v942
    %v1692 = vunpack.c.l.b16 %v943
    %v1693 = vunpack.c.h.b16 %v943
    %v1694 = vunpack.c.l.b16 %v944
    %v1695 = vunpack.c.h.b16 %v944
    %v1696 = vunpack.c.l.b16 %v945
    %v1697 = vunpack.c.h.b16 %v945
    %v1698 = vunpack.c.l.b16 %v946
    %v1699 = vunpack.c.h.b16 %v946
    %v1700 = vunpack.c.l.b16 %v947
    %v1701 = vunpack.c.h.b16 %v947
    %v1702 = vunpack.c.l.b16 %v948
    %v1703 = vunpack.c.h.b16 %v948
    %v1704 = vunpack.c.l.b16 %v949
    %v1705 = vunpack.c.h.b16 %v949
    %v1706 = vunpack.c.l.b16 %v950
    %v1707 = vunpack.c.h.b16 %v950
    %v1708 = vunpack.c.l.b16 %v951
    %v1709 = vunpack.c.h.b16 %v951
    %v1710 = vunpack.c.l.b16 %v952
    %v1711 = vunpack.c.h.b16 %v952
    %v1712 = vunpack.c.l.b16 %v953
    %v1713 = vunpack.c.h.b16 %v953
    %v1714 = vunpack.c.l.b16 %v954
    %v1715 = vunpack.c.h.b16 %v954
    %v1716 = vunpack.c.l.b16 %v955
    %v1717 = vunpack.c.h.b16 %v955
    %v1718 = vunpack.c.l.b16 %v956
    %v1719 = vunpack.c.h.b16 %v956
    %v1720 = vunpack.c.l.b16 %v957
    %v1721 = vunpack.c.h.b16 %v957
    %v1722 = vunpack.c.l.b16 %v958
    %v1723 = vunpack.c.h.b16 %v958
    %v1724 = vunpack.c.l.b16 %v959
    %v1725 = vunpack.c.h.b16 %v959
    %v1726 = vunpack.c.l.b16 %v960
    %v1727 = vunpack.c.h.b16 %v960
    %v1728 = vunpack.c.l.b16 %v961
    %v1729 = vunpack.c.h.b16 %v961
    %v1730 = vunpack.c.l.b16 %v962
    %v1731 = vunpack.c.h.b16 %v962
    %v1732 = vunpack.c.l.b16 %v963
    %v1733 = vunpack.c.h.b16 %v963
    %v1734 = vunpack.c.l.b16 %v964
    %v1735 = vunpack.c.h.b16 %v964
    %v1736 = vunpack.c.l.b16 %v965
    %v1737 = vunpack.c.h.b16 %v965
    %v1738 = vunpack.c.l.b16 %v966
    %v1739 = vunpack.c.h.b16 %v966
    %v1740 = vunpack.c.l.b16 %v967
    %v1741 = vunpack.c.h.b16 %v967
    %v1742 = vunpack.c.l.b16 %v968
    %v1743 = vunpack.c.h.b16 %v968
    %v1744 = vunpack.c.l.b16 %v969
    %v1745 = vunpack.c.h.b16 %v969
    %v1746 = vunpack.c.l.b16 %v970
    %v1747 = vunpack.c.h.b16 %v970
    %v1748 = vunpack.c.l.b16 %v971
    %v1749 = vunpack.c.h.b16 %v971
    %v1750 = vunpack.c.l.b16 %v972
    %v1751 = vunpack.c.h.b16 %v972
    %v1752 = vunpack.c.l.b16 %v973
    %v1753 = vunpack.c.h.b16 %v973
    %v1754 = vunpack.c.l.b16 %v974
    %v1755 = vunpack.c.h.b16 %v974
    %v1756 = vunpack.c.l.b16 %v975
    %v1757 = vunpack.c.h.b16 %v975
    %v1758 = vunpack.c.l.b16 %v976
    %v1759 = vunpack.c.h.b16 %v976
    %v1760 = vunpack.c.l.b16 %v977
    %v1761 = vunpack.c.h.b16 %v977
    %v1762 = vunpack.c.l.b16 %v978
    %v1763 = vunpack.c.h.b16 %v978
    %v1764 = vunpack.c.l.b16 %v979
    %v1765 = vunpack.c.h.b16 %v979
    %v1766 = vunpack.c.l.b16 %v980
    %v1767 = vunpack.c.h.b16 %v980
    %v1768 = vunpack.c.l.b16 %v981
    %v1769 = vunpack.c.h.b16 %v981
    %v1770 = vunpack.c.l.b16 %v982
    %v1771 = vunpack.c.h.b16 %v982
    %v1772 = vunpack.c.l.b16 %v983
    %v1773 = vunpack.c.h.b16 %v983
    %v1774 = vpack.c.b16 %v1266, %v1262
    %v1775 = vpack.c.b16 %v1267, %v1263
    %v1776 = vpack.c.b16 %v1268, %v1264
    %v1777 = vpack.c.b16 %v1269, %v1265
    %v1778 = vpack.c.b16 %v1274, %v1270
    %v1779 = vpack.c.b16 %v1275, %v1271
    %v1780 = vpack.c.b16 %v1276, %v1272
    %v1781 = vpack.c.b16 %v1277, %v1273
    %v1782 = vpack.c.b16 %v1282, %v1278
    %v1783 = vpack.c.b16 %v1283, %v1279
    %v1784 = vpack.c.b16 %v1284, %v1280
    %v1785 = vpack.c.b16 %v1285, %v1281
    %v1786 = vpack.c.b16 %v1290, %v1286
    %v1787 = vpack.c.b16 %v1291, %v1287
    %v1788 = vpack.c.b16 %v1292, %v1288
    %v1789 = vpack.c.b16 %v1293, %v1289
    %v1790 = vpack.c.b16 %v1298, %v1294
    %v1791 = vpack.c.b16 %v1299, %v1295
    %v1792 = vpack.c.b16 %v1300, %v1296
    %v1793 = vpack.c.b16 %v1301, %v1297
    %v1794 = vpack.c.b16 %v1306, %v1302
    %v1795 = vpack.c.b16 %v1307, %v1303
    %v1796 = vpack.c.b16 %v1308, %v1304
    %v1797 = vpack.c.b16 %v1309, %v1305
    %v1798 = vpack.c.b16 %v1314, %v1310
    %v1799 = vpack.c.b16 %v1315, %v1311
    %v1800 = vpack.c.b16 %v1316, %v1312
    %v1801 = vpack.c.b16 %v1317, %v1313
    %v1802 = vpack.c.b16 %v1322, %v1318
    %v1803 = vpack.c.b16 %v1323, %v1319
    %v1804 = vpack.c.b16 %v1324, %v1320
    %v1805 = vpack.c.b16 %v1325, %v1321
    %v1806 = vpack.c.b16 %v1330, %v1326
    %v1807 = vpack.c.b16 %v1331, %v1327
    %v1808 = vpack.c.b16 %v1332, %v1328
    %v1809 = vpack.c.b16 %v1333, %v1329
    %v1810 = vpack.c.b16 %v1338, %v1334
    %v1811 = vpack.c.b16 %v1339, %v1335
    %v1812 = vpack.c.b16 %v1340, %v1336
    %v1813 = vpack.c.b16 %v1341, %v1337
    %v1814 = vpack.c.b16 %v1346, %v1342
    %v1815 = vpack.c.b16 %v1347, %v1343
    %v1816 = vpack.c.b16 %v1348, %v1344
    %v1817 = vpack.c.b16 %v1349, %v1345
    %v1818 = vpack.c.b16 %v1354, %v1350
    %v1819 = vpack.c.b16 %v1355, %v1351
    %v1820 = vpack.c.b16 %v1356, %v1352
    %v1821 = vpack.c.b16 %v1357, %v1353
    %v1822 = vpack.c.b16 %v1362, %v1358
    %v1823 = vpack.c.b16 %v1363, %v1359
    %v1824 = vpack.c.b16 %v1364, %v1360
    %v1825 = vpack.c.b16 %v1365, %v1361
    %v1826 = vpack.c.b16 %v1370, %v1366
    %v1827 = vpack.c.b16 %v1371, %v1367
    %v1828 = vpack.c.b16 %v1372, %v1368
    %v1829 = vpack.c.b16 %v1373, %v1369
    %v1830 = vpack.c.b16 %v1378, %v1374
    %v1831 = vpack.c.b16 %v1379, %v1375
    %v1832 = vpack.c.b16 %v1380, %v1376
    %v1833 = vpack.c.b16 %v1381, %v1377
    %v1834 = vpack.c.b16 %v1386, %v1382
    %v1835 = vpack.c.b16 %v1387, %v1383
    %v1836 = vpack.c.b16 %v1388, %v1384
    %v1837 = vpack.c.b16 %v1389, %v1385
    %v1838 = vpack.c.b16 %v1394, %v1390
    %v1839 = vpack.c.b16 %v1395, %v1391
    %v1840 = vpack.c.b16 %v1396, %v1392
    %v1841 = vpack.c.b16 %v1397, %v1393
    %v1842 = vpack.c.b16 %v1402, %v1398
    %v1843 = vpack.c.b16 %v1403, %v1399
    %v1844 = vpack.c.b16 %v1404, %v1400
    %v1845 = vpack.c.b16 %v1405, %v1401
    %v1846 = vpack.c.b16 %v1410, %v1406
    %v1847 = vpack.c.b16 %v1411, %v1407
    %v1848 = vpack.c.b16 %v1412, %v1408
    %v1849 = vpack.c.b16 %v1413, %v1409
    %v1850 = vpack.c.b16 %v1418, %v1414
    %v1851 = vpack.c.b16 %v1419, %v1415
    %v1852 = vpack.c.b16 %v1420, %v1416
    %v1853 = vpack.c.b16 %v1421, %v1417
    %v1854 = vpack.c.b16 %v1426, %v1422
    %v1855 = vpack.c.b16 %v1427, %v1423
    %v1856 = vpack.c.b16 %v1428, %v1424
    %v1857 = vpack.c.b16 %v1429, %v1425
    %v1858 = vpack.c.b16 %v1434, %v1430
    %v1859 = vpack.c.b16 %v1435, %v1431
    %v1860 = vpack.c.b16 %v1436, %v1432
    %v1861 = vpack.c.b16 %v1437, %v1433
    %v1862 = vpack.c.b16 %v1442, %v1438
    %v1863 = vpack.c.b16 %v1443, %v1439
    %v1864 = vpack.c.b16 %v1444, %v1440
    %v1865 = vpack.c.b16 %v1445, %v1441
    %v1866 = vpack.c.b16 %v1450, %v1446
    %v1867 = vpack.c.b16 %v1451, %v1447
    %v1868 = vpack.c.b16 %v1452, %v1448
    %v1869 = vpack.c.b16 %v1453, %v1449
    %v1870 = vpack.c.b16 %v1458, %v1454
    %v1871 = vpack.c.b16 %v1459, %v1455
    %v1872 = vpack.c.b16 %v1460, %v1456
    %v1873 = vpack.c.b16 %v1461, %v1457
    %v1874 = vpack.c.b16 %v1466, %v1462
    %v1875 = vpack.c.b16 %v1467, %v1463
    %v1876 = vpack.c.b16 %v1468, %v1464
    %v1877 = vpack.c.b16 %v1469, %v1465
    %v1878 = vpack.c.b16 %v1474, %v1470
    %v1879 = vpack.c.b16 %v1475, %v1471
    %v1880 = vpack.c.b16 %v1476, %v1472
    %v1881 = vpack.c.b16 %v1477, %v1473
    %v1882 = vpack.c.b16 %v1482, %v1478
    %v1883 = vpack.c.b16 %v1483, %v1479
    %v1884 = vpack.c.b16 %v1484, %v1480
    %v1885 = vpack.c.b16 %v1485, %v1481
    %v1886 = vpack.c.b16 %v1490, %v1486
    %v1887 = vpack.c.b16 %v1491, %v1487
    %v1888 = vpack.c.b16 %v1492, %v1488
    %v1889 = vpack.c.b16 %v1493, %v1489
    %v1890 = vpack.c.b16 %v1498, %v1494
    %v1891 = vpack.c.b16 %v1499, %v1495
    %v1892 = vpack.c.b16 %v1500, %v1496
    %v1893 = vpack.c.b16 %v1501, %v1497
    %v1894 = vpack.c.b16 %v1506, %v1502
    %v1895 = vpack.c.b16 %v1507, %v1503
    %v1896 = vpack.c.b16 %v1508, %v1504
    %v1897 = vpack.c.b16 %v1509, %v1505
    %v1898 = vpack.c.b16 %v1514, %v1510
    %v1899 = vpack.c.b16 %v1515, %v1511
    %v1900 = vpack.c.b16 %v1516, %v1512
    %v1901 = vpack.c.b16 %v1517, %v1513
    %v1902 = vpack.c.b16 %v1522, %v1518
    %v1903 = vpack.c.b16 %v1523, %v1519
    %v1904 = vpack.c.b16 %v1524, %v1520
    %v1905 = vpack.c.b16 %v1525, %v1521
    %v1906 = vpack.c.b16 %v1530, %v1526
    %v1907 = vpack.c.b16 %v1531, %v1527
    %v1908 = vpack.c.b16 %v1532, %v1528
    %v1909 = vpack.c.b16 %v1533, %v1529
    %v1910 = vpack.c.b16 %v1538, %v1534
    %v1911 = vpack.c.b16 %v1539, %v1535
    %v1912 = vpack.c.b16 %v1540, %v1536
    %v1913 = vpack.c.b16 %v1541, %v1537
    %v1914 = vpack.c.b16 %v1546, %v1542
    %v1915 = vpack.c.b16 %v1547, %v1543
    %v1916 = vpack.c.b16 %v1548, %v1544
    %v1917 = vpack.c.b16 %v1549, %v1545
    %v1918 = vpack.c.b16 %v1554, %v1550
    %v1919 = vpack.c.b16 %v1555, %v1551
    %v1920 = vpack.c.b16 %v1556, %v1552
    %v1921 = vpack.c.b16 %v1557, %v1553
    %v1922 = vpack.c.b16 %v1562, %v1558
    %v1923 = vpack.c.b16 %v1563, %v1559
    %v1924 = vpack.c.b16 %v1564, %v1560
    %v1925 = vpack.c.b16 %v1565, %v1561
    %v1926 = vpack.c.b16 %v1570, %v1566
    %v1927 = vpack.c.b16 %v1571, %v1567
    %v1928 = vpack.c.b16 %v1572, %v1568
    %v1929 = vpack.c.b16 %v1573, %v1569
    %v1930 = vpack.c.b16 %v1578, %v1574
    %v1931 = vpack.c.b16 %v1579, %v1575
    %v1932 = vpack.c.b16 %v1580, %v1576
    %v1933 = vpack.c.b16 %v1581, %v1577
    %v1934 = vpack.c.b16 %v1586, %v1582
    %v1935 = vpack.c.b16 %v1587, %v1583
    %v1936 = vpack.c.b16 %v1588, %v1584
    %v1937 = vpack.c.b16 %v1589, %v1585
    %v1938 = vpack.c.b16 %v1594, %v1590
    %v1939 = vpack.c.b16 %v1595, %v1591
    %v1940 = vpack.c.b16 %v1596, %v1592
    %v1941 = vpack.c.b16 %v1597, %v1593
    %v1942 = vpack.c.b16 %v1602, %v1598
    %v1943 = vpack.c.b16 %v1603, %v1599
    %v1944 = vpack.c.b16 %v1604, %v1600
    %v1945 = vpack.c.b16 %v1605, %v1601
    %v1946 = vpack.c.b16 %v1610, %v1606
    %v1947 = vpack.c.b16 %v1611, %v1607
    %v1948 = vpack.c.b16 %v1612, %v1608
    %v1949 = vpack.c.b16 %v1613, %v1609
    %v1950 = vpack.c.b16 %v1618, %v1614
    %v1951 = vpack.c.b16 %v1619, %v1615
    %v1952 = vpack.c.b16 %v1620, %v1616
    %v1953 = vpack.c.b16 %v1621, %v1617
    %v1954 = vpack.c.b16 %v1626, %v1622
    %v1955 = vpack.c.b16 %v1627, %v1623
    %v1956 = vpack.c.b16 %v1628, %v1624
    %v1957 = vpack.c.b16 %v1629, %v1625
    %v1958 = vpack.c.b16 %v1634, %v1630
    %v1959 = vpack.c.b16 %v1635, %v1631
    %v1960 = vpack.c.b16 %v1636, %v1632
    %v1961 = vpack.c.b16 %v1637, %v1633
    %v1962 = vpack.c.b16 %v1642, %v1638
    %v1963 = vpack.c.b16 %v1643, %v1639
    %v1964 = vpack.c.b16 %v1644, %v1640
    %v1965 = vpack.c.b16 %v1645, %v1641
    %v1966 = vpack.c.b16 %v1650, %v1646
    %v1967 = vpack.c.b16 %v1651, %v1647
    %v1968 = vpack.c.b16 %v1652, %v1648
    %v1969 = vpack.c.b16 %v1653, %v1649
    %v1970 = vpack.c.b16 %v1658, %v1654
    %v1971 = vpack.c.b16 %v1659, %v1655
    %v1972 = vpack.c.b16 %v1660, %v1656
    %v1973 = vpack.c.b16 %v1661, %v1657
    %v1974 = vpack.c.b16 %v1666, %v1662
    %v1975 = vpack.c.b16 %v1667, %v1663
    %v1976 = vpack.c.b16 %v1668, %v1664
    %v1977 = vpack.c.b16 %v1669, %v1665
    %v1978 = vpack.c.b16 %v1674, %v1670
    %v1979 = vpack.c.b16 %v1675, %v1671
    %v1980 = vpack.c.b16 %v1676, %v1672
    %v1981 = vpack.c.b16 %v1677, %v1673
    %v1982 = vpack.c.b16 %v1682, %v1678
    %v1983 = vpack.c.b16 %v1683, %v1679
    %v1984 = vpack.c.b16 %v1684, %v1680
    %v1985 = vpack.c.b16 %v1685, %v1681
    %v1986 = vpack.c.b16 %v1690, %v1686
    %v1987 = vpack.c.b16 %v1691, %v1687
    %v1988 = vpack.c.b16 %v1692, %v1688
    %v1989 = vpack.c.b16 %v1693, %v1689
    %v1990 = vpack.c.b16 %v1698, %v1694
    %v1991 = vpack.c.b16 %v1699, %v1695
    %v1992 = vpack.c.b16 %v1700, %v1696
    %v1993 = vpack.c.b16 %v1701, %v1697
    %v1994 = vpack.c.b16 %v1706, %v1702
    %v1995 = vpack.c.b16 %v1707, %v1703
    %v1996 = vpack.c.b16 %v1708, %v1704
    %v1997 = vpack.c.b16 %v1709, %v1705
    %v1998 = vpack.c.b16 %v1714, %v1710
    %v1999 = vpack.c.b16 %v1715, %v1711
    %v2000 = vpack.c.b16 %v1716, %v1712
    %v2001 = vpack.c.b16 %v1717, %v1713
    %v2002 = vpack.c.b16 %v1722, %v1718
    %v2003 = vpack.c.b16 %v1723, %v1719
    %v2004 = vpack.c.b16 %v1724, %v1720
    %v2005 = vpack.c.b16 %v1725, %v1721
    %v2006 = vpack.c.b16 %v1730, %v1726
    %v2007 = vpack.c.b16 %v1731, %v1727
    %v2008 = vpack.c.b16 %v1732, %v1728
    %v2009 = vpack.c.b16 %v1733, %v1729
    %v2010 = vpack.c.b16 %v1738, %v1734
    %v2011 = vpack.c.b16 %v1739, %v1735
    %v2012 = vpack.c.b16 %v1740, %v1736
    %v2013 = vpack.c.b16 %v1741, %v1737
    %v2014 = vpack.c.b16 %v1746, %v1742
    %v2015 = vpack.c.b16 %v1747, %v1743
    %v2016 = vpack.c.b16 %v1748, %v1744
    %v2017 = vpack.c.b16 %v1749, %v1745
    %v2018 = vpack.c.b16 %v1754, %v1750
    %v2019 = vpack.c.b16 %v1755, %v1751
    %v2020 = vpack.c.b16 %v1756, %v1752
    %v2021 = vpack.c.b16 %v1757, %v1753
    %v2022 = vpack.c.b16 %v1762, %v1758
    %v2023 = vpack.c.b16 %v1763, %v1759
    %v2024 = vpack.c.b16 %v1764, %v1760
    %v2025 = vpack.c.b16 %v1765, %v1761
    %v2026 = vpack.c.b16 %v1770, %v1766
    %v2027 = vpack.c.b16 %v1771, %v1767
    %v2028 = vpack.c.b16 %v1772, %v1768
    %v2029 = vpack.c.b16 %v1773, %v1769
    %2286 = vmatprep.subr.bf16.mxu0 %v1775
    %2287 = vmatpush1.bf16.msra.mxu0 %v1774
    %2288 = vmatprep.subr.bf16.mxu0 %v1779
    %2289 = vmatpush1.bf16.msra.mxu0 %v1778
    %2290 = vmatprep.subr.bf16.mxu0 %v1783
    %2291 = vmatpush1.bf16.msra.mxu0 %v1782
    %2292 = vmatprep.subr.bf16.mxu0 %v1787
    %2293 = vmatpush1.bf16.msra.mxu0 %v1786
    %2294 = vmatprep.subr.bf16.mxu0 %v1791
    %2295 = vmatpush1.bf16.msra.mxu0 %v1790
    %2296 = vmatprep.subr.bf16.mxu0 %v1795
    %2297 = vmatpush1.bf16.msra.mxu0 %v1794
    %2298 = vmatprep.subr.bf16.mxu0 %v1799
    %2299 = vmatpush1.bf16.msra.mxu0 %v1798
    %2300 = vmatprep.subr.bf16.mxu0 %v1803
    %2301 = vmatpush1.bf16.msra.mxu0 %v1802
    %2302 = vmatprep.subr.bf16.mxu0 %v1807
    %2303 = vmatpush1.bf16.msra.mxu0 %v1806
    %2304 = vmatprep.subr.bf16.mxu0 %v1811
    %2305 = vmatpush1.bf16.msra.mxu0 %v1810
    %2306 = vmatprep.subr.bf16.mxu0 %v1815
    %2307 = vmatpush1.bf16.msra.mxu0 %v1814
    %2308 = vmatprep.subr.bf16.mxu0 %v1819
    %2309 = vmatpush1.bf16.msra.mxu0 %v1818
    %2310 = vmatprep.subr.bf16.mxu0 %v1823
    %2311 = vmatpush1.bf16.msra.mxu0 %v1822
    %2312 = vmatprep.subr.bf16.mxu0 %v1827
    %2313 = vmatpush1.bf16.msra.mxu0 %v1826
    %2314 = vmatprep.subr.bf16.mxu0 %v1831
    %2315 = vmatpush1.bf16.msra.mxu0 %v1830
    %2316 = vmatprep.subr.bf16.mxu0 %v1835
    %2317 = vmatpush1.bf16.msra.mxu0 %v1834
    %2318 = vmatprep.mubr.bf16.mxu0 %v721
    %2319 = vmatmul.mubr.bf16.gmra.mrb[0].mxu0 %v720
    %v2320 = vpop.f32.mrb[0].mxu0
    %v2321 = vadd.f32 %v989, %v2320
    %v2322 = vpop.f32.mrb[0].mxu0
    %v2323 = vadd.f32 %v993, %v2322
    %v2324 = vpop.f32.mrb[0].mxu0
    %v2325 = vpop.f32.mrb[0].mxu0
    %2326 = vdwg.mxu0
    %2327 = vmatprep.subr.bf16.mxu0 %v1839
    %2328 = vmatpush1.bf16.msra.mxu0 %v1838
    %2329 = vmatprep.subr.bf16.mxu0 %v1843
    %2330 = vmatpush1.bf16.msra.mxu0 %v1842
    %2331 = vmatprep.subr.bf16.mxu0 %v1847
    %2332 = vmatpush1.bf16.msra.mxu0 %v1846
    %2333 = vmatprep.subr.bf16.mxu0 %v1851
    %2334 = vmatpush1.bf16.msra.mxu0 %v1850
    %2335 = vmatprep.subr.bf16.mxu0 %v1855
    %2336 = vmatpush1.bf16.msra.mxu0 %v1854
    %2337 = vmatprep.subr.bf16.mxu0 %v1859
    %2338 = vmatpush1.bf16.msra.mxu0 %v1858
    %2339 = vmatprep.subr.bf16.mxu0 %v1863
    %2340 = vmatpush1.bf16.msra.mxu0 %v1862
    %2341 = vmatprep.subr.bf16.mxu0 %v1867
    %2342 = vmatpush1.bf16.msra.mxu0 %v1866
    %2343 = vmatprep.subr.bf16.mxu0 %v1871
    %2344 = vmatpush1.bf16.msra.mxu0 %v1870
    %2345 = vmatprep.subr.bf16.mxu0 %v1875
    %2346 = vmatpush1.bf16.msra.mxu0 %v1874
    %2347 = vmatprep.subr.bf16.mxu0 %v1879
    %2348 = vmatpush1.bf16.msra.mxu0 %v1878
    %2349 = vmatprep.subr.bf16.mxu0 %v1883
    %2350 = vmatpush1.bf16.msra.mxu0 %v1882
    %2351 = vmatprep.subr.bf16.mxu0 %v1887
    %2352 = vmatpush1.bf16.msra.mxu0 %v1886
    %2353 = vmatprep.subr.bf16.mxu0 %v1891
    %2354 = vmatpush1.bf16.msra.mxu0 %v1890
    %2355 = vmatprep.subr.bf16.mxu0 %v1895
    %2356 = vmatpush1.bf16.msra.mxu0 %v1894
    %2357 = vmatprep.subr.bf16.mxu0 %v1899
    %2358 = vmatpush1.bf16.msra.mxu0 %v1898
    %2359 = vmatprep.mubr.bf16.mxu0 %v723
    %2360 = vmatmul.mubr.bf16.gmra.mrb[0].mxu0 %v722
    %v2361 = vpop.f32.mrb[0].mxu0
    %v2362 = vadd.f32 %v2321, %v2361
    %v2363 = vpop.f32.mrb[0].mxu0
    %v2364 = vadd.f32 %v2323, %v2363
    %v2365 = vpop.f32.mrb[0].mxu0
    %v2366 = vpop.f32.mrb[0].mxu0
    %2367 = vdwg.mxu0
    %2368 = vmatprep.subr.bf16.mxu0 %v1903
    %2369 = vmatpush1.bf16.msra.mxu0 %v1902
    %2370 = vmatprep.subr.bf16.mxu0 %v1907
    %2371 = vmatpush1.bf16.msra.mxu0 %v1906
    %2372 = vmatprep.subr.bf16.mxu0 %v1911
    %2373 = vmatpush1.bf16.msra.mxu0 %v1910
    %2374 = vmatprep.subr.bf16.mxu0 %v1915
    %2375 = vmatpush1.bf16.msra.mxu0 %v1914
    %2376 = vmatprep.subr.bf16.mxu0 %v1919
    %2377 = vmatpush1.bf16.msra.mxu0 %v1918
    %2378 = vmatprep.subr.bf16.mxu0 %v1923
    %2379 = vmatpush1.bf16.msra.mxu0 %v1922
    %2380 = vmatprep.subr.bf16.mxu0 %v1927
    %2381 = vmatpush1.bf16.msra.mxu0 %v1926
    %2382 = vmatprep.subr.bf16.mxu0 %v1931
    %2383 = vmatpush1.bf16.msra.mxu0 %v1930
    %2384 = vmatprep.subr.bf16.mxu0 %v1935
    %2385 = vmatpush1.bf16.msra.mxu0 %v1934
    %2386 = vmatprep.subr.bf16.mxu0 %v1939
    %2387 = vmatpush1.bf16.msra.mxu0 %v1938
    %2388 = vmatprep.subr.bf16.mxu0 %v1943
    %2389 = vmatpush1.bf16.msra.mxu0 %v1942
    %2390 = vmatprep.subr.bf16.mxu0 %v1947
    %2391 = vmatpush1.bf16.msra.mxu0 %v1946
    %2392 = vmatprep.subr.bf16.mxu0 %v1951
    %2393 = vmatpush1.bf16.msra.mxu0 %v1950
    %2394 = vmatprep.subr.bf16.mxu0 %v1955
    %2395 = vmatpush1.bf16.msra.mxu0 %v1954
    %2396 = vmatprep.subr.bf16.mxu0 %v1959
    %2397 = vmatpush1.bf16.msra.mxu0 %v1958
    %2398 = vmatprep.subr.bf16.mxu0 %v1963
    %2399 = vmatpush1.bf16.msra.mxu0 %v1962
    %2400 = vmatprep.mubr.bf16.mxu0 %v725
    %2401 = vmatmul.mubr.bf16.gmra.mrb[0].mxu0 %v724
    %v2402 = vpop.f32.mrb[0].mxu0
    %v2403 = vadd.f32 %v2362, %v2402
    %v2404 = vpop.f32.mrb[0].mxu0
    %v2405 = vadd.f32 %v2364, %v2404
    %v2406 = vpop.f32.mrb[0].mxu0
    %v2407 = vpop.f32.mrb[0].mxu0
    %2408 = vdwg.mxu0
    %2409 = vmatprep.subr.bf16.mxu0 %v1967
    %2410 = vmatpush1.bf16.msra.mxu0 %v1966
    %2411 = vmatprep.subr.bf16.mxu0 %v1971
    %2412 = vmatpush1.bf16.msra.mxu0 %v1970
    %2413 = vmatprep.subr.bf16.mxu0 %v1975
    %2414 = vmatpush1.bf16.msra.mxu0 %v1974
    %2415 = vmatprep.subr.bf16.mxu0 %v1979
    %2416 = vmatpush1.bf16.msra.mxu0 %v1978
    %2417 = vmatprep.subr.bf16.mxu0 %v1983
    %2418 = vmatpush1.bf16.msra.mxu0 %v1982
    %2419 = vmatprep.subr.bf16.mxu0 %v1987
    %2420 = vmatpush1.bf16.msra.mxu0 %v1986
    %2421 = vmatprep.subr.bf16.mxu0 %v1991
    %2422 = vmatpush1.bf16.msra.mxu0 %v1990
    %2423 = vmatprep.subr.bf16.mxu0 %v1995
    %2424 = vmatpush1.bf16.msra.mxu0 %v1994
    %2425 = vmatprep.subr.bf16.mxu0 %v1999
    %2426 = vmatpush1.bf16.msra.mxu0 %v1998
    %2427 = vmatprep.subr.bf16.mxu0 %v2003
    %2428 = vmatpush1.bf16.msra.mxu0 %v2002
    %2429 = vmatprep.subr.bf16.mxu0 %v2007
    %2430 = vmatpush1.bf16.msra.mxu0 %v2006
    %2431 = vmatprep.subr.bf16.mxu0 %v2011
    %2432 = vmatpush1.bf16.msra.mxu0 %v2010
    %2433 = vmatprep.subr.bf16.mxu0 %v2015
    %2434 = vmatpush1.bf16.msra.mxu0 %v2014
    %2435 = vmatprep.subr.bf16.mxu0 %v2019
    %2436 = vmatpush1.bf16.msra.mxu0 %v2018
    %2437 = vmatprep.subr.bf16.mxu0 %v2023
    %2438 = vmatpush1.bf16.msra.mxu0 %v2022
    %2439 = vmatprep.subr.bf16.mxu0 %v2027
    %2440 = vmatpush1.bf16.msra.mxu0 %v2026
    %2441 = vmatprep.mubr.bf16.mxu0 %v727
    %2442 = vmatmul.mubr.bf16.gmra.mrb[0].mxu0 %v726
    %v2443 = vpop.f32.mrb[0].mxu0
    %v2444 = vadd.f32 %v2403, %v2443
    %v2445 = vpop.f32.mrb[0].mxu0
    %v2446 = vadd.f32 %v2405, %v2445
    %v2447 = vpop.f32.mrb[0].mxu0
    %v2448 = vpop.f32.mrb[0].mxu0
    %2449 = vdwg.mxu0
    %2450 = vmatprep.subr.bf16.mxu0 %v1777
    %2451 = vmatpush1.bf16.msra.mxu0 %v1776
    %2452 = vmatprep.subr.bf16.mxu0 %v1781
    %2453 = vmatpush1.bf16.msra.mxu0 %v1780
    %2454 = vmatprep.subr.bf16.mxu0 %v1785
    %2455 = vmatpush1.bf16.msra.mxu0 %v1784
    %2456 = vmatprep.subr.bf16.mxu0 %v1789
    %2457 = vmatpush1.bf16.msra.mxu0 %v1788
    %2458 = vmatprep.subr.bf16.mxu0 %v1793
    %2459 = vmatpush1.bf16.msra.mxu0 %v1792
    %2460 = vmatprep.subr.bf16.mxu0 %v1797
    %2461 = vmatpush1.bf16.msra.mxu0 %v1796
    %2462 = vmatprep.subr.bf16.mxu0 %v1801
    %2463 = vmatpush1.bf16.msra.mxu0 %v1800
    %2464 = vmatprep.subr.bf16.mxu0 %v1805
    %2465 = vmatpush1.bf16.msra.mxu0 %v1804
    %2466 = vmatprep.subr.bf16.mxu0 %v1809
    %2467 = vmatpush1.bf16.msra.mxu0 %v1808
    %2468 = vmatprep.subr.bf16.mxu0 %v1813
    %2469 = vmatpush1.bf16.msra.mxu0 %v1812
    %2470 = vmatprep.subr.bf16.mxu0 %v1817
    %2471 = vmatpush1.bf16.msra.mxu0 %v1816
    %2472 = vmatprep.subr.bf16.mxu0 %v1821
    %2473 = vmatpush1.bf16.msra.mxu0 %v1820
    %2474 = vmatprep.subr.bf16.mxu0 %v1825
    %2475 = vmatpush1.bf16.msra.mxu0 %v1824
    %2476 = vmatprep.subr.bf16.mxu0 %v1829
    %2477 = vmatpush1.bf16.msra.mxu0 %v1828
    %2478 = vmatprep.subr.bf16.mxu0 %v1833
    %2479 = vmatpush1.bf16.msra.mxu0 %v1832
    %2480 = vmatprep.subr.bf16.mxu0 %v1837
    %2481 = vmatpush1.bf16.msra.mxu0 %v1836
    %2482 = vmatprep.mubr.bf16.mxu0 %v721
    %2483 = vmatmul.mubr.bf16.gmra.mrb[0].mxu0 %v720
    %v2484 = vpop.f32.mrb[0].mxu0
    %v2485 = vadd.f32 %v997, %v2484
    %v2486 = vpop.f32.mrb[0].mxu0
    %v2487 = vadd.f32 %v1001, %v2486
    %v2488 = vpop.f32.mrb[0].mxu0
    %v2489 = vpop.f32.mrb[0].mxu0
    %2490 = vdwg.mxu0
    %2491 = vmatprep.subr.bf16.mxu0 %v1841
    %2492 = vmatpush1.bf16.msra.mxu0 %v1840
    %2493 = vmatprep.subr.bf16.mxu0 %v1845
    %2494 = vmatpush1.bf16.msra.mxu0 %v1844
    %2495 = vmatprep.subr.bf16.mxu0 %v1849
    %2496 = vmatpush1.bf16.msra.mxu0 %v1848
    %2497 = vmatprep.subr.bf16.mxu0 %v1853
    %2498 = vmatpush1.bf16.msra.mxu0 %v1852
    %2499 = vmatprep.subr.bf16.mxu0 %v1857
    %2500 = vmatpush1.bf16.msra.mxu0 %v1856
    %2501 = vmatprep.subr.bf16.mxu0 %v1861
    %2502 = vmatpush1.bf16.msra.mxu0 %v1860
    %2503 = vmatprep.subr.bf16.mxu0 %v1865
    %2504 = vmatpush1.bf16.msra.mxu0 %v1864
    %2505 = vmatprep.subr.bf16.mxu0 %v1869
    %2506 = vmatpush1.bf16.msra.mxu0 %v1868
    %2507 = vmatprep.subr.bf16.mxu0 %v1873
    %2508 = vmatpush1.bf16.msra.mxu0 %v1872
    %2509 = vmatprep.subr.bf16.mxu0 %v1877
    %2510 = vmatpush1.bf16.msra.mxu0 %v1876
    %2511 = vmatprep.subr.bf16.mxu0 %v1881
    %2512 = vmatpush1.bf16.msra.mxu0 %v1880
    %2513 = vmatprep.subr.bf16.mxu0 %v1885
    %2514 = vmatpush1.bf16.msra.mxu0 %v1884
    %2515 = vmatprep.subr.bf16.mxu0 %v1889
    %2516 = vmatpush1.bf16.msra.mxu0 %v1888
    %2517 = vmatprep.subr.bf16.mxu0 %v1893
    %2518 = vmatpush1.bf16.msra.mxu0 %v1892
    %2519 = vmatprep.subr.bf16.mxu0 %v1897
    %2520 = vmatpush1.bf16.msra.mxu0 %v1896
    %2521 = vmatprep.subr.bf16.mxu0 %v1901
    %2522 = vmatpush1.bf16.msra.mxu0 %v1900
    %2523 = vmatprep.mubr.bf16.mxu0 %v723
    %2524 = vmatmul.mubr.bf16.gmra.mrb[0].mxu0 %v722
    %v2525 = vpop.f32.mrb[0].mxu0
    %v2526 = vadd.f32 %v2485, %v2525
    %v2527 = vpop.f32.mrb[0].mxu0
    %v2528 = vadd.f32 %v2487, %v2527
    %v2529 = vpop.f32.mrb[0].mxu0
    %v2530 = vpop.f32.mrb[0].mxu0
    %2531 = vdwg.mxu0
    %2532 = vmatprep.subr.bf16.mxu0 %v1905
    %2533 = vmatpush1.bf16.msra.mxu0 %v1904
    %2534 = vmatprep.subr.bf16.mxu0 %v1909
    %2535 = vmatpush1.bf16.msra.mxu0 %v1908
    %2536 = vmatprep.subr.bf16.mxu0 %v1913
    %2537 = vmatpush1.bf16.msra.mxu0 %v1912
    %2538 = vmatprep.subr.bf16.mxu0 %v1917
    %2539 = vmatpush1.bf16.msra.mxu0 %v1916
    %2540 = vmatprep.subr.bf16.mxu0 %v1921
    %2541 = vmatpush1.bf16.msra.mxu0 %v1920
    %2542 = vmatprep.subr.bf16.mxu0 %v1925
    %2543 = vmatpush1.bf16.msra.mxu0 %v1924
    %2544 = vmatprep.subr.bf16.mxu0 %v1929
    %2545 = vmatpush1.bf16.msra.mxu0 %v1928
    %2546 = vmatprep.subr.bf16.mxu0 %v1933
    %2547 = vmatpush1.bf16.msra.mxu0 %v1932
    %2548 = vmatprep.subr.bf16.mxu0 %v1937
    %2549 = vmatpush1.bf16.msra.mxu0 %v1936
    %2550 = vmatprep.subr.bf16.mxu0 %v1941
    %2551 = vmatpush1.bf16.msra.mxu0 %v1940
    %2552 = vmatprep.subr.bf16.mxu0 %v1945
    %2553 = vmatpush1.bf16.msra.mxu0 %v1944
    %2554 = vmatprep.subr.bf16.mxu0 %v1949
    %2555 = vmatpush1.bf16.msra.mxu0 %v1948
    %2556 = vmatprep.subr.bf16.mxu0 %v1953
    %2557 = vmatpush1.bf16.msra.mxu0 %v1952
    %2558 = vmatprep.subr.bf16.mxu0 %v1957
    %2559 = vmatpush1.bf16.msra.mxu0 %v1956
    %2560 = vmatprep.subr.bf16.mxu0 %v1961
    %2561 = vmatpush1.bf16.msra.mxu0 %v1960
    %2562 = vmatprep.subr.bf16.mxu0 %v1965
    %2563 = vmatpush1.bf16.msra.mxu0 %v1964
    %2564 = vmatprep.mubr.bf16.mxu0 %v725
    %2565 = vmatmul.mubr.bf16.gmra.mrb[0].mxu0 %v724
    %v2566 = vpop.f32.mrb[0].mxu0
    %v2567 = vadd.f32 %v2526, %v2566
    %v2568 = vpop.f32.mrb[0].mxu0
    %v2569 = vadd.f32 %v2528, %v2568
    %v2570 = vpop.f32.mrb[0].mxu0
    %v2571 = vpop.f32.mrb[0].mxu0
    %2572 = vdwg.mxu0
    %2573 = vmatprep.subr.bf16.mxu0 %v1969
    %2574 = vmatpush1.bf16.msra.mxu0 %v1968
    %2575 = vmatprep.subr.bf16.mxu0 %v1973
    %2576 = vmatpush1.bf16.msra.mxu0 %v1972
    %2577 = vmatprep.subr.bf16.mxu0 %v1977
    %2578 = vmatpush1.bf16.msra.mxu0 %v1976
    %2579 = vmatprep.subr.bf16.mxu0 %v1981
    %2580 = vmatpush1.bf16.msra.mxu0 %v1980
    %2581 = vmatprep.subr.bf16.mxu0 %v1985
    %2582 = vmatpush1.bf16.msra.mxu0 %v1984
    %2583 = vmatprep.subr.bf16.mxu0 %v1989
    %2584 = vmatpush1.bf16.msra.mxu0 %v1988
    %2585 = vmatprep.subr.bf16.mxu0 %v1993
    %2586 = vmatpush1.bf16.msra.mxu0 %v1992
    %2587 = vmatprep.subr.bf16.mxu0 %v1997
    %2588 = vmatpush1.bf16.msra.mxu0 %v1996
    %2589 = vmatprep.subr.bf16.mxu0 %v2001
    %2590 = vmatpush1.bf16.msra.mxu0 %v2000
    %2591 = vmatprep.subr.bf16.mxu0 %v2005
    %2592 = vmatpush1.bf16.msra.mxu0 %v2004
    %2593 = vmatprep.subr.bf16.mxu0 %v2009
    %2594 = vmatpush1.bf16.msra.mxu0 %v2008
    %2595 = vmatprep.subr.bf16.mxu0 %v2013
    %2596 = vmatpush1.bf16.msra.mxu0 %v2012
    %2597 = vmatprep.subr.bf16.mxu0 %v2017
    %2598 = vmatpush1.bf16.msra.mxu0 %v2016
    %2599 = vmatprep.subr.bf16.mxu0 %v2021
    %2600 = vmatpush1.bf16.msra.mxu0 %v2020
    %2601 = vmatprep.subr.bf16.mxu0 %v2025
    %2602 = vmatpush1.bf16.msra.mxu0 %v2024
    %2603 = vmatprep.subr.bf16.mxu0 %v2029
    %2604 = vmatpush1.bf16.msra.mxu0 %v2028
    %2605 = vmatprep.mubr.bf16.mxu0 %v727
    %2606 = vmatmul.mubr.bf16.gmra.mrb[0].mxu0 %v726
    %v2607 = vpop.f32.mrb[0].mxu0
    %v2608 = vadd.f32 %v2567, %v2607
    %v2609 = vpop.f32.mrb[0].mxu0
    %v2610 = vadd.f32 %v2569, %v2609
    %v2611 = vpop.f32.mrb[0].mxu0
    %v2612 = vpop.f32.mrb[0].mxu0
    %2613 = vdwg.mxu0
    %v2614 = vmax.f32 %v2444, 0.0
    %v2615 = vmax.f32 %v2446, 0.0
    %v2616 = vmax.f32 %v2608, 0.0
    %v2617 = vmax.f32 %v2610, 0.0
    %v2618 = vpack.c.bf16 %v2614, %v2614
    %v2619 = vpack.c.bf16 %v2615, %v2615
    %v2620 = vpack.c.bf16 %v2616, %v2616
    %v2621 = vpack.c.bf16 %v2617, %v2617
    %v2622 = vld [vmem:[#allocation11] sm:$0xff]
    %v2623 = vld [vmem:[#allocation11 + $0x8] sm:$0xff]
    %v2624 = vld [vmem:[#allocation11 + $0x10] sm:$0xff]
    %v2625 = vld [vmem:[#allocation11 + $0x18] sm:$0xff]
    %v2626 = vld [vmem:[#allocation11 + $0x20] sm:$0xff]
    %v2627 = vld [vmem:[#allocation11 + $0x28] sm:$0xff]
    %v2628 = vld [vmem:[#allocation11 + $0x30] sm:$0xff]
    %v2629 = vld [vmem:[#allocation11 + $0x38] sm:$0xff]
    %v2630 = vld [vmem:[#allocation11 + $0x40] sm:$0xff]
    %v2631 = vld [vmem:[#allocation11 + $0x48] sm:$0xff]
    %v2632 = vld [vmem:[#allocation11 + $0x50] sm:$0xff]
    %v2633 = vld [vmem:[#allocation11 + $0x58] sm:$0xff]
    %v2634 = vld [vmem:[#allocation11 + $0x60] sm:$0xff]
    %v2635 = vld [vmem:[#allocation11 + $0x68] sm:$0xff]
    %v2636 = vld [vmem:[#allocation11 + $0x70] sm:$0xff]
    %v2637 = vld [vmem:[#allocation11 + $0x78] sm:$0xff]
    %v2638 = vld [vmem:[#allocation11 + $0x80] sm:$0xff]
    %v2639 = vld [vmem:[#allocation11 + $0x88] sm:$0xff]
    %v2640 = vld [vmem:[#allocation11 + $0x90] sm:$0xff]
    %v2641 = vld [vmem:[#allocation11 + $0x98] sm:$0xff]
    %v2642 = vld [vmem:[#allocation11 + $0xa0] sm:$0xff]
    %v2643 = vld [vmem:[#allocation11 + $0xa8] sm:$0xff]
    %v2644 = vld [vmem:[#allocation11 + $0xb0] sm:$0xff]
    %v2645 = vld [vmem:[#allocation11 + $0xb8] sm:$0xff]
    %v2646 = vld [vmem:[#allocation11 + $0xc0] sm:$0xff]
    %v2647 = vld [vmem:[#allocation11 + $0xc8] sm:$0xff]
    %v2648 = vld [vmem:[#allocation11 + $0xd0] sm:$0xff]
    %v2649 = vld [vmem:[#allocation11 + $0xd8] sm:$0xff]
    %v2650 = vld [vmem:[#allocation11 + $0xe0] sm:$0xff]
    %v2651 = vld [vmem:[#allocation11 + $0xe8] sm:$0xff]
    %v2652 = vld [vmem:[#allocation11 + $0xf0] sm:$0xff]
    %v2653 = vld [vmem:[#allocation11 + $0xf8] sm:$0xff]
    %v2654 = vld [vmem:[#allocation11 + $0x100] sm:$0xff]
    %v2655 = vld [vmem:[#allocation11 + $0x108] sm:$0xff]
    %v2656 = vld [vmem:[#allocation11 + $0x110] sm:$0xff]
    %v2657 = vld [vmem:[#allocation11 + $0x118] sm:$0xff]
    %v2658 = vld [vmem:[#allocation11 + $0x120] sm:$0xff]
    %v2659 = vld [vmem:[#allocation11 + $0x128] sm:$0xff]
    %v2660 = vld [vmem:[#allocation11 + $0x130] sm:$0xff]
    %v2661 = vld [vmem:[#allocation11 + $0x138] sm:$0xff]
    %v2662 = vld [vmem:[#allocation11 + $0x140] sm:$0xff]
    %v2663 = vld [vmem:[#allocation11 + $0x148] sm:$0xff]
    %v2664 = vld [vmem:[#allocation11 + $0x150] sm:$0xff]
    %v2665 = vld [vmem:[#allocation11 + $0x158] sm:$0xff]
    %v2666 = vld [vmem:[#allocation11 + $0x160] sm:$0xff]
    %v2667 = vld [vmem:[#allocation11 + $0x168] sm:$0xff]
    %v2668 = vld [vmem:[#allocation11 + $0x170] sm:$0xff]
    %v2669 = vld [vmem:[#allocation11 + $0x178] sm:$0xff]
    %v2670 = vld [vmem:[#allocation11 + $0x180] sm:$0xff]
    %v2671 = vld [vmem:[#allocation11 + $0x188] sm:$0xff]
    %v2672 = vld [vmem:[#allocation11 + $0x190] sm:$0xff]
    %v2673 = vld [vmem:[#allocation11 + $0x198] sm:$0xff]
    %v2674 = vld [vmem:[#allocation11 + $0x1a0] sm:$0xff]
    %v2675 = vld [vmem:[#allocation11 + $0x1a8] sm:$0xff]
    %v2676 = vld [vmem:[#allocation11 + $0x1b0] sm:$0xff]
    %v2677 = vld [vmem:[#allocation11 + $0x1b8] sm:$0xff]
    %v2678 = vld [vmem:[#allocation11 + $0x1c0] sm:$0xff]
    %v2679 = vld [vmem:[#allocation11 + $0x1c8] sm:$0xff]
    %v2680 = vld [vmem:[#allocation11 + $0x1d0] sm:$0xff]
    %v2681 = vld [vmem:[#allocation11 + $0x1d8] sm:$0xff]
    %v2682 = vld [vmem:[#allocation11 + $0x1e0] sm:$0xff]
    %v2683 = vld [vmem:[#allocation11 + $0x1e8] sm:$0xff]
    %v2684 = vld [vmem:[#allocation11 + $0x1f0] sm:$0xff]
    %v2685 = vld [vmem:[#allocation11 + $0x1f8] sm:$0xff]
    %v2686 = vld [vmem:[%s8] sm:$0x3]
    %v2688 = vlaneseq
    %v2689 = vshrl.u32 %v2688, 7
    %v2690 = vsub.s32 0, %v2689
    %v2691 = vrot.slane %v2686, %v2690
    %v2692 = vlaneseq
    %v2693 = vshrl.u32 %v2692, 7
    %v2694 = vsub.s32 1, %v2693
    %v2695 = vrot.slane %v2686, %v2694
    %v2762 = vunpack.c.l.b16 %v2622
    %v2763 = vunpack.c.h.b16 %v2622
    %v2764 = vunpack.c.l.b16 %v2623
    %v2765 = vunpack.c.h.b16 %v2623
    %v2766 = vunpack.c.l.b16 %v2624
    %v2767 = vunpack.c.h.b16 %v2624
    %v2768 = vunpack.c.l.b16 %v2625
    %v2769 = vunpack.c.h.b16 %v2625
    %v2770 = vunpack.c.l.b16 %v2626
    %v2771 = vunpack.c.h.b16 %v2626
    %v2772 = vunpack.c.l.b16 %v2627
    %v2773 = vunpack.c.h.b16 %v2627
    %v2774 = vunpack.c.l.b16 %v2628
    %v2775 = vunpack.c.h.b16 %v2628
    %v2776 = vunpack.c.l.b16 %v2629
    %v2777 = vunpack.c.h.b16 %v2629
    %v2778 = vunpack.c.l.b16 %v2630
    %v2779 = vunpack.c.h.b16 %v2630
    %v2780 = vunpack.c.l.b16 %v2631
    %v2781 = vunpack.c.h.b16 %v2631
    %v2782 = vunpack.c.l.b16 %v2632
    %v2783 = vunpack.c.h.b16 %v2632
    %v2784 = vunpack.c.l.b16 %v2633
    %v2785 = vunpack.c.h.b16 %v2633
    %v2786 = vunpack.c.l.b16 %v2634
    %v2787 = vunpack.c.h.b16 %v2634
    %v2788 = vunpack.c.l.b16 %v2635
    %v2789 = vunpack.c.h.b16 %v2635
    %v2790 = vunpack.c.l.b16 %v2636
    %v2791 = vunpack.c.h.b16 %v2636
    %v2792 = vunpack.c.l.b16 %v2637
    %v2793 = vunpack.c.h.b16 %v2637
    %v2794 = vunpack.c.l.b16 %v2638
    %v2795 = vunpack.c.h.b16 %v2638
    %v2796 = vunpack.c.l.b16 %v2639
    %v2797 = vunpack.c.h.b16 %v2639
    %v2798 = vunpack.c.l.b16 %v2640
    %v2799 = vunpack.c.h.b16 %v2640
    %v2800 = vunpack.c.l.b16 %v2641
    %v2801 = vunpack.c.h.b16 %v2641
    %v2802 = vunpack.c.l.b16 %v2642
    %v2803 = vunpack.c.h.b16 %v2642
    %v2804 = vunpack.c.l.b16 %v2643
    %v2805 = vunpack.c.h.b16 %v2643
    %v2806 = vunpack.c.l.b16 %v2644
    %v2807 = vunpack.c.h.b16 %v2644
    %v2808 = vunpack.c.l.b16 %v2645
    %v2809 = vunpack.c.h.b16 %v2645
    %v2810 = vunpack.c.l.b16 %v2646
    %v2811 = vunpack.c.h.b16 %v2646
    %v2812 = vunpack.c.l.b16 %v2647
    %v2813 = vunpack.c.h.b16 %v2647
    %v2814 = vunpack.c.l.b16 %v2648
    %v2815 = vunpack.c.h.b16 %v2648
    %v2816 = vunpack.c.l.b16 %v2649
    %v2817 = vunpack.c.h.b16 %v2649
    %v2818 = vunpack.c.l.b16 %v2650
    %v2819 = vunpack.c.h.b16 %v2650
    %v2820 = vunpack.c.l.b16 %v2651
    %v2821 = vunpack.c.h.b16 %v2651
    %v2822 = vunpack.c.l.b16 %v2652
    %v2823 = vunpack.c.h.b16 %v2652
    %v2824 = vunpack.c.l.b16 %v2653
    %v2825 = vunpack.c.h.b16 %v2653
    %v2826 = vunpack.c.l.b16 %v2654
    %v2827 = vunpack.c.h.b16 %v2654
    %v2828 = vunpack.c.l.b16 %v2655
    %v2829 = vunpack.c.h.b16 %v2655
    %v2830 = vunpack.c.l.b16 %v2656
    %v2831 = vunpack.c.h.b16 %v2656
    %v2832 = vunpack.c.l.b16 %v2657
    %v2833 = vunpack.c.h.b16 %v2657
    %v2834 = vunpack.c.l.b16 %v2658
    %v2835 = vunpack.c.h.b16 %v2658
    %v2836 = vunpack.c.l.b16 %v2659
    %v2837 = vunpack.c.h.b16 %v2659
    %v2838 = vunpack.c.l.b16 %v2660
    %v2839 = vunpack.c.h.b16 %v2660
    %v2840 = vunpack.c.l.b16 %v2661
    %v2841 = vunpack.c.h.b16 %v2661
    %v2842 = vunpack.c.l.b16 %v2662
    %v2843 = vunpack.c.h.b16 %v2662
    %v2844 = vunpack.c.l.b16 %v2663
    %v2845 = vunpack.c.h.b16 %v2663
    %v2846 = vunpack.c.l.b16 %v2664
    %v2847 = vunpack.c.h.b16 %v2664
    %v2848 = vunpack.c.l.b16 %v2665
    %v2849 = vunpack.c.h.b16 %v2665
    %v2850 = vunpack.c.l.b16 %v2666
    %v2851 = vunpack.c.h.b16 %v2666
    %v2852 = vunpack.c.l.b16 %v2667
    %v2853 = vunpack.c.h.b16 %v2667
    %v2854 = vunpack.c.l.b16 %v2668
    %v2855 = vunpack.c.h.b16 %v2668
    %v2856 = vunpack.c.l.b16 %v2669
    %v2857 = vunpack.c.h.b16 %v2669
    %v2858 = vunpack.c.l.b16 %v2670
    %v2859 = vunpack.c.h.b16 %v2670
    %v2860 = vunpack.c.l.b16 %v2671
    %v2861 = vunpack.c.h.b16 %v2671
    %v2862 = vunpack.c.l.b16 %v2672
    %v2863 = vunpack.c.h.b16 %v2672
    %v2864 = vunpack.c.l.b16 %v2673
    %v2865 = vunpack.c.h.b16 %v2673
    %v2866 = vunpack.c.l.b16 %v2674
    %v2867 = vunpack.c.h.b16 %v2674
    %v2868 = vunpack.c.l.b16 %v2675
    %v2869 = vunpack.c.h.b16 %v2675
    %v2870 = vunpack.c.l.b16 %v2676
    %v2871 = vunpack.c.h.b16 %v2676
    %v2872 = vunpack.c.l.b16 %v2677
    %v2873 = vunpack.c.h.b16 %v2677
    %v2874 = vunpack.c.l.b16 %v2678
    %v2875 = vunpack.c.h.b16 %v2678
    %v2876 = vunpack.c.l.b16 %v2679
    %v2877 = vunpack.c.h.b16 %v2679
    %v2878 = vunpack.c.l.b16 %v2680
    %v2879 = vunpack.c.h.b16 %v2680
    %v2880 = vunpack.c.l.b16 %v2681
    %v2881 = vunpack.c.h.b16 %v2681
    %v2882 = vunpack.c.l.b16 %v2682
    %v2883 = vunpack.c.h.b16 %v2682
    %v2884 = vunpack.c.l.b16 %v2683
    %v2885 = vunpack.c.h.b16 %v2683
    %v2886 = vunpack.c.l.b16 %v2684
    %v2887 = vunpack.c.h.b16 %v2684
    %v2888 = vunpack.c.l.b16 %v2685
    %v2889 = vunpack.c.h.b16 %v2685
    %v2890 = vpack.c.b16 %v2764, %v2762
    %v2891 = vpack.c.b16 %v2765, %v2763
    %v2892 = vpack.c.b16 %v2768, %v2766
    %v2893 = vpack.c.b16 %v2769, %v2767
    %v2894 = vpack.c.b16 %v2772, %v2770
    %v2895 = vpack.c.b16 %v2773, %v2771
    %v2896 = vpack.c.b16 %v2776, %v2774
    %v2897 = vpack.c.b16 %v2777, %v2775
    %v2898 = vpack.c.b16 %v2780, %v2778
    %v2899 = vpack.c.b16 %v2781, %v2779
    %v2900 = vpack.c.b16 %v2784, %v2782
    %v2901 = vpack.c.b16 %v2785, %v2783
    %v2902 = vpack.c.b16 %v2788, %v2786
    %v2903 = vpack.c.b16 %v2789, %v2787
    %v2904 = vpack.c.b16 %v2792, %v2790
    %v2905 = vpack.c.b16 %v2793, %v2791
    %v2906 = vpack.c.b16 %v2796, %v2794
    %v2907 = vpack.c.b16 %v2797, %v2795
    %v2908 = vpack.c.b16 %v2800, %v2798
    %v2909 = vpack.c.b16 %v2801, %v2799
    %v2910 = vpack.c.b16 %v2804, %v2802
    %v2911 = vpack.c.b16 %v2805, %v2803
    %v2912 = vpack.c.b16 %v2808, %v2806
    %v2913 = vpack.c.b16 %v2809, %v2807
    %v2914 = vpack.c.b16 %v2812, %v2810
    %v2915 = vpack.c.b16 %v2813, %v2811
    %v2916 = vpack.c.b16 %v2816, %v2814
    %v2917 = vpack.c.b16 %v2817, %v2815
    %v2918 = vpack.c.b16 %v2820, %v2818
    %v2919 = vpack.c.b16 %v2821, %v2819
    %v2920 = vpack.c.b16 %v2824, %v2822
    %v2921 = vpack.c.b16 %v2825, %v2823
    %v2922 = vpack.c.b16 %v2828, %v2826
    %v2923 = vpack.c.b16 %v2829, %v2827
    %v2924 = vpack.c.b16 %v2832, %v2830
    %v2925 = vpack.c.b16 %v2833, %v2831
    %v2926 = vpack.c.b16 %v2836, %v2834
    %v2927 = vpack.c.b16 %v2837, %v2835
    %v2928 = vpack.c.b16 %v2840, %v2838
    %v2929 = vpack.c.b16 %v2841, %v2839
    %v2930 = vpack.c.b16 %v2844, %v2842
    %v2931 = vpack.c.b16 %v2845, %v2843
    %v2932 = vpack.c.b16 %v2848, %v2846
    %v2933 = vpack.c.b16 %v2849, %v2847
    %v2934 = vpack.c.b16 %v2852, %v2850
    %v2935 = vpack.c.b16 %v2853, %v2851
    %v2936 = vpack.c.b16 %v2856, %v2854
    %v2937 = vpack.c.b16 %v2857, %v2855
    %v2938 = vpack.c.b16 %v2860, %v2858
    %v2939 = vpack.c.b16 %v2861, %v2859
    %v2940 = vpack.c.b16 %v2864, %v2862
    %v2941 = vpack.c.b16 %v2865, %v2863
    %v2942 = vpack.c.b16 %v2868, %v2866
    %v2943 = vpack.c.b16 %v2869, %v2867
    %v2944 = vpack.c.b16 %v2872, %v2870
    %v2945 = vpack.c.b16 %v2873, %v2871
    %v2946 = vpack.c.b16 %v2876, %v2874
    %v2947 = vpack.c.b16 %v2877, %v2875
    %v2948 = vpack.c.b16 %v2880, %v2878
    %v2949 = vpack.c.b16 %v2881, %v2879
    %v2950 = vpack.c.b16 %v2884, %v2882
    %v2951 = vpack.c.b16 %v2885, %v2883
    %v2952 = vpack.c.b16 %v2888, %v2886
    %v2953 = vpack.c.b16 %v2889, %v2887
    %3018 = vmatprep.subr.bf16.mxu0 %v2891
    %3019 = vmatpush1.bf16.msra.mxu0 %v2890
    %3020 = vmatprep.subr.bf16.mxu0 %v2893
    %3021 = vmatpush1.bf16.msra.mxu0 %v2892
    %3022 = vmatprep.subr.bf16.mxu0 %v2895
    %3023 = vmatpush1.bf16.msra.mxu0 %v2894
    %3024 = vmatprep.subr.bf16.mxu0 %v2897
    %3025 = vmatpush1.bf16.msra.mxu0 %v2896
    %3026 = vmatprep.subr.bf16.mxu0 %v2899
    %3027 = vmatpush1.bf16.msra.mxu0 %v2898
    %3028 = vmatprep.subr.bf16.mxu0 %v2901
    %3029 = vmatpush1.bf16.msra.mxu0 %v2900
    %3030 = vmatprep.subr.bf16.mxu0 %v2903
    %3031 = vmatpush1.bf16.msra.mxu0 %v2902
    %3032 = vmatprep.subr.bf16.mxu0 %v2905
    %3033 = vmatpush1.bf16.msra.mxu0 %v2904
    %3034 = vmatprep.subr.bf16.mxu0 %v2907
    %3035 = vmatpush1.bf16.msra.mxu0 %v2906
    %3036 = vmatprep.subr.bf16.mxu0 %v2909
    %3037 = vmatpush1.bf16.msra.mxu0 %v2908
    %3038 = vmatprep.subr.bf16.mxu0 %v2911
    %3039 = vmatpush1.bf16.msra.mxu0 %v2910
    %3040 = vmatprep.subr.bf16.mxu0 %v2913
    %3041 = vmatpush1.bf16.msra.mxu0 %v2912
    %3042 = vmatprep.subr.bf16.mxu0 %v2915
    %3043 = vmatpush1.bf16.msra.mxu0 %v2914
    %3044 = vmatprep.subr.bf16.mxu0 %v2917
    %3045 = vmatpush1.bf16.msra.mxu0 %v2916
    %3046 = vmatprep.subr.bf16.mxu0 %v2919
    %3047 = vmatpush1.bf16.msra.mxu0 %v2918
    %3048 = vmatprep.subr.bf16.mxu0 %v2921
    %3049 = vmatpush1.bf16.msra.mxu0 %v2920
    %3050 = vmatprep.mubr.bf16.mxu0 %v2619
    %3051 = vmatmul.mubr.bf16.gmra.mrb[0].mxu0 %v2618
    %v3052 = vpop.f32.mrb[0].mxu0
    %v3053 = vadd.f32 %v2691, %v3052
    %v3054 = vpop.f32.mrb[0].mxu0
    %v3055 = vadd.f32 %v2695, %v3054
    %v3056 = vpop.f32.mrb[0].mxu0
    %v3057 = vpop.f32.mrb[0].mxu0
    %3058 = vdwg.mxu0
    %3059 = vmatprep.subr.bf16.mxu0 %v2923
    %3060 = vmatpush1.bf16.msra.mxu0 %v2922
    %3061 = vmatprep.subr.bf16.mxu0 %v2925
    %3062 = vmatpush1.bf16.msra.mxu0 %v2924
    %3063 = vmatprep.subr.bf16.mxu0 %v2927
    %3064 = vmatpush1.bf16.msra.mxu0 %v2926
    %3065 = vmatprep.subr.bf16.mxu0 %v2929
    %3066 = vmatpush1.bf16.msra.mxu0 %v2928
    %3067 = vmatprep.subr.bf16.mxu0 %v2931
    %3068 = vmatpush1.bf16.msra.mxu0 %v2930
    %3069 = vmatprep.subr.bf16.mxu0 %v2933
    %3070 = vmatpush1.bf16.msra.mxu0 %v2932
    %3071 = vmatprep.subr.bf16.mxu0 %v2935
    %3072 = vmatpush1.bf16.msra.mxu0 %v2934
    %3073 = vmatprep.subr.bf16.mxu0 %v2937
    %3074 = vmatpush1.bf16.msra.mxu0 %v2936
    %3075 = vmatprep.subr.bf16.mxu0 %v2939
    %3076 = vmatpush1.bf16.msra.mxu0 %v2938
    %3077 = vmatprep.subr.bf16.mxu0 %v2941
    %3078 = vmatpush1.bf16.msra.mxu0 %v2940
    %3079 = vmatprep.subr.bf16.mxu0 %v2943
    %3080 = vmatpush1.bf16.msra.mxu0 %v2942
    %3081 = vmatprep.subr.bf16.mxu0 %v2945
    %3082 = vmatpush1.bf16.msra.mxu0 %v2944
    %3083 = vmatprep.subr.bf16.mxu0 %v2947
    %3084 = vmatpush1.bf16.msra.mxu0 %v2946
    %3085 = vmatprep.subr.bf16.mxu0 %v2949
    %3086 = vmatpush1.bf16.msra.mxu0 %v2948
    %3087 = vmatprep.subr.bf16.mxu0 %v2951
    %3088 = vmatpush1.bf16.msra.mxu0 %v2950
    %3089 = vmatprep.subr.bf16.mxu0 %v2953
    %3090 = vmatpush1.bf16.msra.mxu0 %v2952
    %3091 = vmatprep.mubr.bf16.mxu0 %v2621
    %3092 = vmatmul.mubr.bf16.gmra.mrb[0].mxu0 %v2620
    %v3093 = vpop.f32.mrb[0].mxu0
    %v3094 = vadd.f32 %v3053, %v3093
    %v3095 = vpop.f32.mrb[0].mxu0
    %v3096 = vadd.f32 %v3055, %v3095
    %v3097 = vpop.f32.mrb[0].mxu0
    %v3098 = vpop.f32.mrb[0].mxu0
    %3099 = vdwg.mxu0
    %v3100 = vmax.f32 %v3094, 0.0
    %v3101 = vmax.f32 %v3096, 0.0
    %v3102 = vpack.c.bf16 %v3100, %v3100
    %v3103 = vpack.c.bf16 %v3101, %v3101
    %v3104 = vld [vmem:[#allocation13] sm:$0xf]
    %v3105 = vld [vmem:[#allocation13 + $0x4] sm:$0xf]
    %v3106 = vld [vmem:[#allocation13 + $0x8] sm:$0xf]
    %v3107 = vld [vmem:[#allocation13 + $0xc] sm:$0xf]
    %v3108 = vld [vmem:[#allocation13 + $0x10] sm:$0xf]
    %v3109 = vld [vmem:[#allocation13 + $0x14] sm:$0xf]
    %v3110 = vld [vmem:[#allocation13 + $0x18] sm:$0xf]
    %v3111 = vld [vmem:[#allocation13 + $0x1c] sm:$0xf]
    %v3112 = vld [vmem:[#allocation13 + $0x20] sm:$0xf]
    %v3113 = vld [vmem:[#allocation13 + $0x24] sm:$0xf]
    %v3114 = vld [vmem:[#allocation13 + $0x28] sm:$0xf]
    %v3115 = vld [vmem:[#allocation13 + $0x2c] sm:$0xf]
    %v3116 = vld [vmem:[#allocation13 + $0x30] sm:$0xf]
    %v3117 = vld [vmem:[#allocation13 + $0x34] sm:$0xf]
    %v3118 = vld [vmem:[#allocation13 + $0x38] sm:$0xf]
    %v3119 = vld [vmem:[#allocation13 + $0x3c] sm:$0xf]
    %v3120 = vld [vmem:[#allocation13 + $0x40] sm:$0xf]
    %v3121 = vld [vmem:[#allocation13 + $0x44] sm:$0xf]
    %v3122 = vld [vmem:[#allocation13 + $0x48] sm:$0xf]
    %v3123 = vld [vmem:[#allocation13 + $0x4c] sm:$0xf]
    %v3124 = vld [vmem:[#allocation13 + $0x50] sm:$0xf]
    %v3125 = vld [vmem:[#allocation13 + $0x54] sm:$0xf]
    %v3126 = vld [vmem:[#allocation13 + $0x58] sm:$0xf]
    %v3127 = vld [vmem:[#allocation13 + $0x5c] sm:$0xf]
    %v3128 = vld [vmem:[#allocation13 + $0x60] sm:$0xf]
    %v3129 = vld [vmem:[#allocation13 + $0x64] sm:$0xf]
    %v3130 = vld [vmem:[#allocation13 + $0x68] sm:$0xf]
    %v3131 = vld [vmem:[#allocation13 + $0x6c] sm:$0xf]
    %v3132 = vld [vmem:[#allocation13 + $0x70] sm:$0xf]
    %v3133 = vld [vmem:[#allocation13 + $0x74] sm:$0xf]
    %v3134 = vld [vmem:[#allocation13 + $0x78] sm:$0xf]
    %v3135 = vld [vmem:[#allocation13 + $0x7c] sm:$0xf]
    %v3136 = vld [vmem:[%s10] sm:$0x1]
    %v3138 = vlaneseq
    %v3139 = vshrl.u32 %v3138, 7
    %v3140 = vsub.s32 0, %v3139
    %v3141 = vrot.slane %v3136, %v3140
    %v3175 = vunpack.c.l.b16 %v3104
    %v3176 = vunpack.c.l.b16 %v3105
    %v3177 = vunpack.c.l.b16 %v3106
    %v3178 = vunpack.c.l.b16 %v3107
    %v3179 = vunpack.c.l.b16 %v3108
    %v3180 = vunpack.c.l.b16 %v3109
    %v3181 = vunpack.c.l.b16 %v3110
    %v3182 = vunpack.c.l.b16 %v3111
    %v3183 = vunpack.c.l.b16 %v3112
    %v3184 = vunpack.c.l.b16 %v3113
    %v3185 = vunpack.c.l.b16 %v3114
    %v3186 = vunpack.c.l.b16 %v3115
    %v3187 = vunpack.c.l.b16 %v3116
    %v3188 = vunpack.c.l.b16 %v3117
    %v3189 = vunpack.c.l.b16 %v3118
    %v3190 = vunpack.c.l.b16 %v3119
    %v3191 = vunpack.c.l.b16 %v3120
    %v3192 = vunpack.c.l.b16 %v3121
    %v3193 = vunpack.c.l.b16 %v3122
    %v3194 = vunpack.c.l.b16 %v3123
    %v3195 = vunpack.c.l.b16 %v3124
    %v3196 = vunpack.c.l.b16 %v3125
    %v3197 = vunpack.c.l.b16 %v3126
    %v3198 = vunpack.c.l.b16 %v3127
    %v3199 = vunpack.c.l.b16 %v3128
    %v3200 = vunpack.c.l.b16 %v3129
    %v3201 = vunpack.c.l.b16 %v3130
    %v3202 = vunpack.c.l.b16 %v3131
    %v3203 = vunpack.c.l.b16 %v3132
    %v3204 = vunpack.c.l.b16 %v3133
    %v3205 = vunpack.c.l.b16 %v3134
    %v3206 = vunpack.c.l.b16 %v3135
    %v3207 = vpack.c.b16 %v3176, %v3175
    %v3208 = vpack.c.b16 %v3178, %v3177
    %v3209 = vpack.c.b16 %v3180, %v3179
    %v3210 = vpack.c.b16 %v3182, %v3181
    %v3211 = vpack.c.b16 %v3184, %v3183
    %v3212 = vpack.c.b16 %v3186, %v3185
    %v3213 = vpack.c.b16 %v3188, %v3187
    %v3214 = vpack.c.b16 %v3190, %v3189
    %v3215 = vpack.c.b16 %v3192, %v3191
    %v3216 = vpack.c.b16 %v3194, %v3193
    %v3217 = vpack.c.b16 %v3196, %v3195
    %v3218 = vpack.c.b16 %v3198, %v3197
    %v3219 = vpack.c.b16 %v3200, %v3199
    %v3220 = vpack.c.b16 %v3202, %v3201
    %v3221 = vpack.c.b16 %v3204, %v3203
    %v3222 = vpack.c.b16 %v3206, %v3205
    %3239 = vmatprep.subr.bf16.mxu0 0
    %3240 = vmatpush1.bf16.msra.mxu0 %v3207
    %3241 = vmatprep.subr.bf16.mxu0 0
    %3242 = vmatpush1.bf16.msra.mxu0 %v3208
    %3243 = vmatprep.subr.bf16.mxu0 0
    %3244 = vmatpush1.bf16.msra.mxu0 %v3209
    %3245 = vmatprep.subr.bf16.mxu0 0
    %3246 = vmatpush1.bf16.msra.mxu0 %v3210
    %3247 = vmatprep.subr.bf16.mxu0 0
    %3248 = vmatpush1.bf16.msra.mxu0 %v3211
    %3249 = vmatprep.subr.bf16.mxu0 0
    %3250 = vmatpush1.bf16.msra.mxu0 %v3212
    %3251 = vmatprep.subr.bf16.mxu0 0
    %3252 = vmatpush1.bf16.msra.mxu0 %v3213
    %3253 = vmatprep.subr.bf16.mxu0 0
    %3254 = vmatpush1.bf16.msra.mxu0 %v3214
    %3255 = vmatprep.subr.bf16.mxu0 0
    %3256 = vmatpush1.bf16.msra.mxu0 %v3215
    %3257 = vmatprep.subr.bf16.mxu0 0
    %3258 = vmatpush1.bf16.msra.mxu0 %v3216
    %3259 = vmatprep.subr.bf16.mxu0 0
    %3260 = vmatpush1.bf16.msra.mxu0 %v3217
    %3261 = vmatprep.subr.bf16.mxu0 0
    %3262 = vmatpush1.bf16.msra.mxu0 %v3218
    %3263 = vmatprep.subr.bf16.mxu0 0
    %3264 = vmatpush1.bf16.msra.mxu0 %v3219
    %3265 = vmatprep.subr.bf16.mxu0 0
    %3266 = vmatpush1.bf16.msra.mxu0 %v3220
    %3267 = vmatprep.subr.bf16.mxu0 0
    %3268 = vmatpush1.bf16.msra.mxu0 %v3221
    %3269 = vmatprep.subr.bf16.mxu0 0
    %3270 = vmatpush1.bf16.msra.mxu0 %v3222
    %3271 = vmatprep.mubr.bf16.mxu0 %v3103
    %3272 = vmatmul.mubr.bf16.gmra.mrb[0].mxu0 %v3102
    %v3273 = vpop.f32.mrb[0].mxu0
    %v3274 = vadd.f32 %v3141, %v3273
    %v3275 = vpop.f32.mrb[0].mxu0
    %v3276 = vpop.f32.mrb[0].mxu0
    %v3277 = vpop.f32.mrb[0].mxu0
    %3278 = vdwg.mxu0
    %3279 = vst [vmem:[#allocation14] sm:$0xff] %v3274
    // Predicated region
    $region74: #{tpu_custom_call.1} parent=1 // pred_check
      _
    $region75: #{tpu_custom_call.1} parent=1 // pred_check_branch
      %3281 = sbr.rel (0) target = $region77
    $region76: #{tpu_custom_call.1} parent=1 // pred_region
      %s3283 = ssub.s32 128, 128
      %3284 = vsyncadd [#allocation4], %s3283
      %s3286 = sshll.u32 [#allocation14], 4
      %s3287 = int_to_ptr.vmem [resolvable:$true] %s3286
      %3289 = dma.vmem_to_hbm [thread:$0]  %s3287, 128, %s11, [#allocation4]
    $region77: #{tpu_custom_call.1} parent=1 // pred_fallthru
      _
    // Predicated region
    $region78: #{tpu_custom_call.1} parent=1 // pred_check
      _
    $region79: #{tpu_custom_call.1} parent=1 // pred_check_branch
      %3291 = sbr.rel (0) target = $region81
    $region80: #{tpu_custom_call.1} parent=1 // pred_region
      %3292 = dma.done [#allocation4], 128
    $region81: #{tpu_custom_call.1} parent=1 // pred_fallthru
      _
    %3293 = vsyncpa [#allocation3], 1
    %3294 = vsyncpa [#allocation6], 1
    %3295 = vsyncpa [#allocation9], 1
    %3296 = vsyncpa [#allocation12], 1
    %3297 = vsyncpa [#allocation4], 1

</llo_original>
